<compile_context>
chip_gen: v5e
topology: v5e:2x2
jax: 0.10.0
libtpu: 0.0.40
codegen_flags: <defaults>
</compile_context>

<pallas_src>
import jax
import jax.numpy as jnp
import numpy as np
from jax.experimental import pallas as pl
from jax.experimental.pallas import tpu as pltpu


def _discriminator_kernel(t_ref, i_ref, w1t_ref, w1i_ref, b1_ref,
                          w2_ref, b2_ref, o_ref):
    # Cast activations to bf16 in-kernel (VPU slot is free; avoids an extra
    # un-fused HBM pass that a wrapper-side astype would cost).
    t = t_ref[...].astype(jnp.bfloat16)
    im = i_ref[...].astype(jnp.bfloat16)

    # Layer 1: cat(t, i) @ W1  ==  t @ W1_t + i @ W1_i   (bf16 in, f32 MXU acc).
    h = jnp.dot(t, w1t_ref[...], preferred_element_type=jnp.float32)
    h = h + jnp.dot(im, w1i_ref[...], preferred_element_type=jnp.float32)
    h = jnp.maximum(h + b1_ref[...], 0.0)                      # bias + ReLU (f32)

    # Layer 2 (512 -> 1): VPU multiply by the broadcast W2 row + XLU lane
    # reduction. Skips the zero-padded MXU matmul and keeps the output at its
    # true single-column width (no writeback amplification).
    logit = jnp.sum(h * w2_ref[...], axis=1, keepdims=True) + b2_ref[...]  # (tile_b, 1)

    # Sigmoid on tile_b elements only: EUP exp + approx EUP reciprocal.
    o_ref[...] = pl.reciprocal(1.0 + jnp.exp(-logit), approx=True)


def _choose_tile_b(B, hidden, img_dim, itemsize):
    """Pick a batch tile: as large as practical (multiple of 256, <=1024),
    activation buffers well inside VMEM, and >=2 grid steps when B allows
    (keeps both v7x TensorCores busy)."""
    if B <= 256:
        return B                       # one exact tile (block == full batch dim)
    act_budget = 24 * 1024 * 1024      # double-buffered activation DMA budget
    for t in (1024, 512, 256):
        act_bytes = 2 * t * (hidden + img_dim) * itemsize   # 2 bufs x 2 inputs tile
        if act_bytes <= act_budget and B >= 2 * t:
            return t
    return 256


def cross_modal_discriminator(text_features, image_features, params):
    """text_features: (B, hidden), image_features: (B, 1024) -> (B, 1) probs."""
    w1t, w1i, b1, w2_row, b2 = params
    B, hidden = text_features.shape
    img_dim = image_features.shape[1]
    h1 = w1t.shape[1]

    itemsize = jnp.dtype(text_features.dtype).itemsize
    tile_b = _choose_tile_b(B, hidden, img_dim, itemsize)
    num_tiles = pl.cdiv(B, tile_b)

    flops = 2 * B * (hidden + img_dim) * h1 + 3 * B * h1
    bytes_accessed = (
        B * (hidden + img_dim) * itemsize          # activations (single f32 pass)
        + (hidden + img_dim) * h1 * 2              # bf16 W1 (resident)
        + h1 * 4 * 2 + 4                           # b1, w2 row, b2
        + B * 4                                    # (B, 1) f32 output
    )

    out = pl.pallas_call(
        _discriminator_kernel,
        out_shape=jax.ShapeDtypeStruct((B, 1), jnp.float32),
        grid=(num_tiles,),
        in_specs=[
            pl.BlockSpec((tile_b, hidden), lambda b: (b, 0)),   # text tile
            pl.BlockSpec((tile_b, img_dim), lambda b: (b, 0)),  # image tile
            pl.BlockSpec((hidden, h1), lambda b: (0, 0)),       # W1_t (VMEM-resident)
            pl.BlockSpec((img_dim, h1), lambda b: (0, 0)),      # W1_i (VMEM-resident)
            pl.BlockSpec((1, h1), lambda b: (0, 0)),            # b1   (resident)
            pl.BlockSpec((1, h1), lambda b: (0, 0)),            # W2 row (resident)
            pl.BlockSpec((1, 1), lambda b: (0, 0)),             # b2   (resident)
        ],
        out_specs=pl.BlockSpec((tile_b, 1), lambda b: (b, 0)),
        compiler_params=pltpu.CompilerParams(
            dimension_semantics=("parallel",),        # 2-TC sharding on v7x
            vmem_limit_bytes=48 * 1024 * 1024,        # headroom under v7x 64 MiB
        ),
        cost_estimate=pl.CostEstimate(
            flops=flops, transcendentals=2 * B, bytes_accessed=bytes_accessed),
    )(text_features, image_features, w1t, w1i, b1, w2_row, b2)

    return out


def init_params(hidden_size, key):
    """Deterministic synthetic parameters, pre-formatted for the kernel
    (bf16 W1 halves, transposed W2 row) so no per-call weight rewrite ops."""
    in_dim = hidden_size + 1024
    k1, k2, k3, k4 = jax.random.split(key, 4)
    # Linear(in_dim, 512)
    scale1 = 1.0 / np.sqrt(in_dim)
    w1 = jax.random.uniform(k1, (in_dim, 512), jnp.float32, -scale1, scale1)
    b1 = jax.random.uniform(k2, (1, 512), jnp.float32, -scale1, scale1)
    # Linear(512, 1)
    scale2 = 1.0 / np.sqrt(512)
    w2 = jax.random.uniform(k3, (512, 1), jnp.float32, -scale2, scale2)
    b2 = jax.random.uniform(k4, (1, 1), jnp.float32, -scale2, scale2)
    # Split W1 into text rows / image rows (folds the concat into two matmuls),
    # cast once to bf16; W2 stored as a (1, 512) row for the in-kernel reduction.
    w1t = w1[:hidden_size, :].astype(jnp.bfloat16)
    w1i = w1[hidden_size:, :].astype(jnp.bfloat16)
    w2_row = jnp.asarray(w2.T, jnp.float32)          # (1, 512)
    return w1t, w1i, b1, w2_row, b2


def _reference(text_features, image_features, params):
    w1t, w1i, b1, w2_row, b2 = params
    w1 = jnp.concatenate([w1t, w1i], axis=0).astype(jnp.float32)
    combined = jnp.concatenate([text_features, image_features], axis=1)
    h = jnp.maximum(combined @ w1 + b1, 0.0)
    return jax.nn.sigmoid(h @ w2_row.T + b2)


if __name__ == "__main__":
    batch = 8
    hidden_size = 32

    key = jax.random.PRNGKey(0)
    k_t, k_i, k_p = jax.random.split(key, 3)
    text_features = jax.random.normal(k_t, (batch, hidden_size), jnp.float32)
    image_features = jax.random.normal(k_i, (batch, 1024), jnp.float32)
    params = init_params(hidden_size, k_p)

    out = cross_modal_discriminator(text_features, image_features, params)
    out = jax.block_until_ready(out)

    ref = _reference(text_features, image_features, params)
    assert out.shape == (batch, 1)
    # bf16 matmul inputs/weights + approx EUP reciprocal in the sigmoid ->
    # compare with a loose tolerance (documented: not bit-equal to f32 ref).
    np.testing.assert_allclose(np.asarray(out), np.asarray(ref),
                               rtol=2e-2, atol=2e-2)
    print("KERNEL_OK")
</pallas_src>

<mosaic_0001>
module attributes {stable_mosaic.version = 11 : i64} {
  func.func @_discriminator_kernel(%arg0: i32, %arg1: memref<8x32xf32, #tpu.memory_space<vmem>>, %arg2: memref<8x1024xf32, #tpu.memory_space<vmem>>, %arg3: memref<32x512xbf16, #tpu.memory_space<vmem>>, %arg4: memref<1024x512xbf16, #tpu.memory_space<vmem>>, %arg5: memref<1x512xf32, #tpu.memory_space<vmem>>, %arg6: memref<1x512xf32, #tpu.memory_space<vmem>>, %arg7: memref<1x1xf32, #tpu.memory_space<vmem>>, %arg8: memref<8x1xf32, #tpu.memory_space<vmem>>) attributes {dimension_semantics = [#tpu.dimension_semantics<parallel>], iteration_bounds = array<i64: 1>, scalar_prefetch = 0 : i64, scratch_operands = 0 : i64, tpu.core_type = #tpu.core_type<tc>, window_params = [{transform_indices = @transform_0, window_bounds = array<i64: 8, 32>}, {transform_indices = @transform_1, window_bounds = array<i64: 8, 1024>}, {pipeline_mode = #tpu.pipeline_mode<synchronous>, transform_indices = @transform_2, window_bounds = array<i64: 32, 512>}, {pipeline_mode = #tpu.pipeline_mode<synchronous>, transform_indices = @transform_3, window_bounds = array<i64: 1024, 512>}, {pipeline_mode = #tpu.pipeline_mode<synchronous>, transform_indices = @transform_4, window_bounds = array<i64: 1, 512>}, {pipeline_mode = #tpu.pipeline_mode<synchronous>, transform_indices = @transform_5, window_bounds = array<i64: 1, 512>}, {pipeline_mode = #tpu.pipeline_mode<synchronous>, transform_indices = @transform_6, window_bounds = array<i64: 1, 1>}, {transform_indices = @transform_7, window_bounds = array<i64: 8, 1>}]} {
    %c0 = arith.constant 0 : index
    %c0_0 = arith.constant 0 : index
    %0 = vector.load %arg1[%c0, %c0_0] : memref<8x32xf32, #tpu.memory_space<vmem>>, vector<8x32xf32>
    %1 = arith.truncf %0 : vector<8x32xf32> to vector<8x32xbf16>
    %c0_1 = arith.constant 0 : index
    %c0_2 = arith.constant 0 : index
    %2 = vector.load %arg2[%c0_1, %c0_2] : memref<8x1024xf32, #tpu.memory_space<vmem>>, vector<8x1024xf32>
    %3 = arith.truncf %2 : vector<8x1024xf32> to vector<8x1024xbf16>
    %c0_3 = arith.constant 0 : index
    %c0_4 = arith.constant 0 : index
    %4 = vector.load %arg3[%c0_3, %c0_4] : memref<32x512xbf16, #tpu.memory_space<vmem>>, vector<32x512xbf16>
    %cst = arith.constant dense<0.000000e+00> : vector<8x512xf32>
    %5 = tpu.matmul %1, %4, %cst {dimension_numbers = #tpu.dot_dimension_numbers<[1], [0], [0], [1], [0, 0, 1, 1], [], []>} : vector<8x32xbf16>, vector<32x512xbf16>, vector<8x512xf32> -> vector<8x512xf32>
    %c0_5 = arith.constant 0 : index
    %c0_6 = arith.constant 0 : index
    %6 = vector.load %arg4[%c0_5, %c0_6] : memref<1024x512xbf16, #tpu.memory_space<vmem>>, vector<1024x512xbf16>
    %cst_7 = arith.constant dense<0.000000e+00> : vector<8x512xf32>
    %7 = tpu.matmul %3, %6, %cst_7 {dimension_numbers = #tpu.dot_dimension_numbers<[1], [0], [0], [1], [0, 0, 1, 1], [], []>} : vector<8x1024xbf16>, vector<1024x512xbf16>, vector<8x512xf32> -> vector<8x512xf32>
    %8 = arith.addf %5, %7 : vector<8x512xf32>
    %c0_8 = arith.constant 0 : index
    %c0_9 = arith.constant 0 : index
    %9 = vector.load %arg5[%c0_8, %c0_9] : memref<1x512xf32, #tpu.memory_space<vmem>>, vector<1x512xf32>
    %10 = vector.broadcast %9 : vector<1x512xf32> to vector<8x512xf32>
    %11 = arith.addf %8, %10 : vector<8x512xf32>
    %cst_10 = arith.constant 0.000000e+00 : f32
    %12 = vector.broadcast %cst_10 : f32 to vector<8x512xf32>
    %13 = arith.maximumf %11, %12 : vector<8x512xf32>
    %c0_11 = arith.constant 0 : index
    %c0_12 = arith.constant 0 : index
    %14 = vector.load %arg6[%c0_11, %c0_12] : memref<1x512xf32, #tpu.memory_space<vmem>>, vector<1x512xf32>
    %15 = vector.broadcast %14 : vector<1x512xf32> to vector<8x512xf32>
    %16 = arith.mulf %13, %15 : vector<8x512xf32>
    %cst_13 = arith.constant dense<0.000000e+00> : vector<8xf32>
    %17 = vector.multi_reduction <add>, %16, %cst_13 [1] : vector<8x512xf32> to vector<8xf32>
    %18 = vector.shape_cast %17 : vector<8xf32> to vector<8x1xf32>
    %c0_14 = arith.constant 0 : index
    %c0_15 = arith.constant 0 : index
    %19 = vector.load %arg7[%c0_14, %c0_15] : memref<1x1xf32, #tpu.memory_space<vmem>>, vector<1x1xf32>
    %20 = vector.broadcast %19 : vector<1x1xf32> to vector<8x1xf32>
    %21 = arith.addf %18, %20 : vector<8x1xf32>
    %cst_16 = arith.constant 0.000000e+00 : f32
    %22 = vector.broadcast %cst_16 : f32 to vector<8x1xf32>
    %23 = arith.subf %22, %21 : vector<8x1xf32>
    %24 = math.exp %23 : vector<8x1xf32>
    %cst_17 = arith.constant 1.000000e+00 : f32
    %25 = vector.broadcast %cst_17 : f32 to vector<8x1xf32>
    %26 = arith.addf %25, %24 : vector<8x1xf32>
    %27 = tpu.reciprocal %26 {approx = true} : vector<8x1xf32> -> vector<8x1xf32>
    %c0_18 = arith.constant 0 : index
    %c0_19 = arith.constant 0 : index
    %28 = vector.load %arg8[%c0_18, %c0_19] : memref<8x1xf32, #tpu.memory_space<vmem>>, vector<8x1xf32>
    tpu.vector_store %arg8[%c0_18, %c0_19], %27 {strides = array<i32>} : memref<8x1xf32, #tpu.memory_space<vmem>>, vector<8x1xf32>,
    return
  }
  func.func @transform_0(%arg0: i32) -> (i32, i32) {
    %c0_i32 = arith.constant 0 : i32
    %c0_i32_0 = arith.constant 0 : i32
    return %arg0, %c0_i32 : i32, i32
  }
  func.func @transform_1(%arg0: i32) -> (i32, i32) {
    %c0_i32 = arith.constant 0 : i32
    %c0_i32_0 = arith.constant 0 : i32
    return %arg0, %c0_i32 : i32, i32
  }
  func.func @transform_2(%arg0: i32) -> (i32, i32) {
    %c0_i32 = arith.constant 0 : i32
    %c0_i32_0 = arith.constant 0 : i32
    %c0_i32_1 = arith.constant 0 : i32
    return %c0_i32, %c0_i32_0 : i32, i32
  }
  func.func @transform_3(%arg0: i32) -> (i32, i32) {
    %c0_i32 = arith.constant 0 : i32
    %c0_i32_0 = arith.constant 0 : i32
    %c0_i32_1 = arith.constant 0 : i32
    return %c0_i32, %c0_i32_0 : i32, i32
  }
  func.func @transform_4(%arg0: i32) -> (i32, i32) {
    %c0_i32 = arith.constant 0 : i32
    %c0_i32_0 = arith.constant 0 : i32
    %c0_i32_1 = arith.constant 0 : i32
    return %c0_i32, %c0_i32_0 : i32, i32
  }
  func.func @transform_5(%arg0: i32) -> (i32, i32) {
    %c0_i32 = arith.constant 0 : i32
    %c0_i32_0 = arith.constant 0 : i32
    %c0_i32_1 = arith.constant 0 : i32
    return %c0_i32, %c0_i32_0 : i32, i32
  }
  func.func @transform_6(%arg0: i32) -> (i32, i32) {
    %c0_i32 = arith.constant 0 : i32
    %c0_i32_0 = arith.constant 0 : i32
    %c0_i32_1 = arith.constant 0 : i32
    return %c0_i32, %c0_i32_0 : i32, i32
  }
  func.func @transform_7(%arg0: i32) -> (i32, i32) {
    %c0_i32 = arith.constant 0 : i32
    %c0_i32_0 = arith.constant 0 : i32
    return %arg0, %c0_i32 : i32, i32
  }
}

</mosaic_0001>

<llo_original>
// kernel: tpu_custom_call.1
$region0: #{tpu_custom_call.1}
  #allocation0 [shape = 'u32[]', space=smem, size = 0x4, offset = 0x4, fixed_abs, tag = 'smem constant byte address 0x4 - core index']
  #allocation1 [shape = 'u32[72,128]{1,0:T(1,128)}', space=vmem, size = 0x9000, scoped, tag = 'internal scratch']
  #allocation2 [shape = 'f32[1,1]{1,0:T(1,128)S(1)}', space=vmem, size = 0x200, scoped, tag = 'scoped memory for tpu_custom_call.1']
  %s0 = inlined_call_operand.hbm [shape: f32[8,32], index: 0, kind: input, shape index: {}]
  %s1 = inlined_call_operand.hbm [shape: f32[8,1024], index: 1, kind: input, shape index: {}]
  %s2 = inlined_call_operand.hbm [shape: bf16[32,512], index: 2, kind: input, shape index: {}]
  %s3 = inlined_call_operand.hbm [shape: bf16[1024,512], index: 3, kind: input, shape index: {}]
  %s4 = inlined_call_operand.vmem [shape: f32[1,512], index: 4, kind: input, shape index: {}]
  %s5 = inlined_call_operand.hbm [shape: f32[1,512], index: 5, kind: input, shape index: {}]
  %s6 = inlined_call_operand.<no memory space> [shape: f32[1,1], index: 6, kind: input, shape index: {}]
  %s7 = inlined_call_operand.vmem [shape: f32[8,1], index: 7, kind: output, shape index: {}]
  %s8 = sld [smem:[#allocation0]]
  $region58: #{tpu_custom_call.1} parent=0
    _
  %s10 = ssub.s32 1, %s8
  %s11 = scalar_select 0, %s10, %s8
  %v12 = vstv %s6
  %13 = vst [vmem:[#allocation2] sm:$0x1] %v12
  $region1: #{tpu_custom_call.1} parent=0
    #allocation3 [shape = 'u8[4096]{0}', space=vmem, size = 0x1000, scoped, tag = 'input window, operand 0, single buffered']
    #allocation4 [shape = 's32[1]{0}', space=sflag, size = 0x4, scoped, tag = 'scoped memory for tpu_custom_call.1']
    #allocation5 [shape = 'u8[32768]{0}', space=vmem, size = 0x8000, scoped, tag = 'input window, operand 1, single buffered']
    #allocation6 [shape = 's32[1]{0}', space=sflag, size = 0x4, scoped, tag = 'scoped memory for tpu_custom_call.1']
    #allocation7 [shape = 'u8[32768]{0}', space=vmem, size = 0x8000, scoped, tag = 'input window, operand 2, single buffered']
    #allocation8 [shape = 'u8[1048576]{0}', space=vmem, size = 0x100000, scoped, tag = 'input window, operand 3, single buffered']
    #allocation9 [shape = 's32[1]{0}', space=sflag, size = 0x4, scoped, tag = 'scoped memory for tpu_custom_call.1']
    #allocation10 [shape = 'u8[2048]{0}', space=vmem, size = 0x800, scoped, tag = 'input window, operand 5, single buffered']
    %14 = vsyncpa [#allocation4], 0
    %15 = vsyncpa [#allocation6], 0
    %16 = vsyncpa [#allocation9], 0
    // Predicated region
    $region2: #{tpu_custom_call.1} parent=1 // pred_check
      _
    $region3: #{tpu_custom_call.1} parent=1 // pred_check_branch
      %18 = sbr.rel (0) target = $region5
    $region4: #{tpu_custom_call.1} parent=1 // pred_region
      %20 = vsyncadd [#allocation4], 0
      %s22 = sshll.u32 %s0, 4
      %s23 = int_to_ptr.hbm [resolvable:$true] %s22
      %s24 = sshll.u32 [#allocation3], 4
      %s25 = int_to_ptr.vmem [resolvable:$true] %s24
      %27 = dma.hbm_to_vmem [thread:$0]  %s23, 128, %s25, [#allocation4]
    $region5: #{tpu_custom_call.1} parent=1 // pred_fallthru
      _
    // Predicated region
    $region6: #{tpu_custom_call.1} parent=1 // pred_check
      _
    $region7: #{tpu_custom_call.1} parent=1 // pred_check_branch
      %29 = sbr.rel (0) target = $region9
    $region8: #{tpu_custom_call.1} parent=1 // pred_region
      %31 = vsyncadd [#allocation6], 0
      %s33 = sshll.u32 %s1, 4
      %s34 = int_to_ptr.hbm [resolvable:$true] %s33
      %s35 = sshll.u32 [#allocation5], 4
      %s36 = int_to_ptr.vmem [resolvable:$true] %s35
      %38 = dma.hbm_to_vmem [thread:$0]  %s34, 1024, %s36, [#allocation6]
    $region9: #{tpu_custom_call.1} parent=1 // pred_fallthru
      _
    // Predicated region
    $region10: #{tpu_custom_call.1} parent=1 // pred_check
      _
    $region11: #{tpu_custom_call.1} parent=1 // pred_check_branch
      %40 = sbr.rel (0) target = $region13
    $region12: #{tpu_custom_call.1} parent=1 // pred_region
      %42 = vsyncadd [#allocation6], 0
      %s43 = sshll.u32 %s2, 4
      %s44 = int_to_ptr.hbm [resolvable:$true] %s43
      %s45 = sshll.u32 [#allocation7], 4
      %s46 = int_to_ptr.vmem [resolvable:$true] %s45
      %51 = dma.hbm_to_vmem [thread:$0]  %s44, 1024, %s46, [#allocation6], 256, 256, 16
    $region13: #{tpu_custom_call.1} parent=1 // pred_fallthru
      _
    // Predicated region
    $region14: #{tpu_custom_call.1} parent=1 // pred_check
      _
    $region15: #{tpu_custom_call.1} parent=1 // pred_check_branch
      %53 = sbr.rel (0) target = $region17
    $region16: #{tpu_custom_call.1} parent=1 // pred_region
      %55 = vsyncadd [#allocation9], 0
      %s56 = sshll.u32 %s3, 4
      %s57 = int_to_ptr.hbm [resolvable:$true] %s56
      %s58 = sshll.u32 [#allocation8], 4
      %s59 = int_to_ptr.vmem [resolvable:$true] %s58
      %64 = dma.hbm_to_vmem [thread:$0]  %s57, 32768, %s59, [#allocation9], 256, 256, 16
    $region17: #{tpu_custom_call.1} parent=1 // pred_fallthru
      _
    // Predicated region
    $region18: #{tpu_custom_call.1} parent=1 // pred_check
      _
    $region19: #{tpu_custom_call.1} parent=1 // pred_check_branch
      %66 = sbr.rel (0) target = $region21
    $region20: #{tpu_custom_call.1} parent=1 // pred_region
      _
    $region21: #{tpu_custom_call.1} parent=1 // pred_fallthru
      _
    // Predicated region
    $region22: #{tpu_custom_call.1} parent=1 // pred_check
      _
    $region23: #{tpu_custom_call.1} parent=1 // pred_check_branch
      %68 = sbr.rel (0) target = $region25
    $region24: #{tpu_custom_call.1} parent=1 // pred_region
      %70 = vsyncadd [#allocation9], 0
      %s72 = sshll.u32 %s5, 4
      %s73 = int_to_ptr.hbm [resolvable:$true] %s72
      %s74 = sshll.u32 [#allocation10], 4
      %s75 = int_to_ptr.vmem [resolvable:$true] %s74
      %77 = dma.hbm_to_vmem [thread:$0]  %s73, 64, %s75, [#allocation9]
    $region25: #{tpu_custom_call.1} parent=1 // pred_fallthru
      _
    // Predicated region
    $region26: #{tpu_custom_call.1} parent=1 // pred_check
      _
    $region27: #{tpu_custom_call.1} parent=1 // pred_check_branch
      %79 = sbr.rel (0) target = $region29
    $region28: #{tpu_custom_call.1} parent=1 // pred_region
      _
    $region29: #{tpu_custom_call.1} parent=1 // pred_fallthru
      _
    // Predicated region
    $region30: #{tpu_custom_call.1} parent=1 // pred_check
      _
    $region31: #{tpu_custom_call.1} parent=1 // pred_check_branch
      %81 = sbr.rel (0) target = $region33
    $region32: #{tpu_custom_call.1} parent=1 // pred_region
      %83 = dma.done [#allocation4], 128
    $region33: #{tpu_custom_call.1} parent=1 // pred_fallthru
      _
    // Predicated region
    $region34: #{tpu_custom_call.1} parent=1 // pred_check
      _
    $region35: #{tpu_custom_call.1} parent=1 // pred_check_branch
      %85 = sbr.rel (0) target = $region37
    $region36: #{tpu_custom_call.1} parent=1 // pred_region
      %87 = dma.done [#allocation6], 1024
    $region37: #{tpu_custom_call.1} parent=1 // pred_fallthru
      _
    // Predicated region
    $region38: #{tpu_custom_call.1} parent=1 // pred_check
      _
    $region39: #{tpu_custom_call.1} parent=1 // pred_check_branch
      %89 = sbr.rel (0) target = $region41
    $region40: #{tpu_custom_call.1} parent=1 // pred_region
      %91 = dma.done [#allocation6], 1024
    $region41: #{tpu_custom_call.1} parent=1 // pred_fallthru
      _
    // Predicated region
    $region42: #{tpu_custom_call.1} parent=1 // pred_check
      _
    $region43: #{tpu_custom_call.1} parent=1 // pred_check_branch
      %93 = sbr.rel (0) target = $region45
    $region44: #{tpu_custom_call.1} parent=1 // pred_region
      %95 = dma.done [#allocation9], 32768
    $region45: #{tpu_custom_call.1} parent=1 // pred_fallthru
      _
    // Predicated region
    $region46: #{tpu_custom_call.1} parent=1 // pred_check
      _
    $region47: #{tpu_custom_call.1} parent=1 // pred_check_branch
      %97 = sbr.rel (0) target = $region49
    $region48: #{tpu_custom_call.1} parent=1 // pred_region
      %99 = dma.done [#allocation9], 64
    $region49: #{tpu_custom_call.1} parent=1 // pred_fallthru
      _
    %v101 = vld [vmem:[#allocation3] sm:$0xff]
    %v102 = vpack.c.bf16 %v101, %v101
    %v103 = vld [vmem:[#allocation5] sm:$0xff]
    %v104 = vld [vmem:[#allocation5 + $0x8] sm:$0xff]
    %v105 = vld [vmem:[#allocation5 + $0x10] sm:$0xff]
    %v106 = vld [vmem:[#allocation5 + $0x18] sm:$0xff]
    %v107 = vld [vmem:[#allocation5 + $0x20] sm:$0xff]
    %v108 = vld [vmem:[#allocation5 + $0x28] sm:$0xff]
    %v109 = vld [vmem:[#allocation5 + $0x30] sm:$0xff]
    %v110 = vld [vmem:[#allocation5 + $0x38] sm:$0xff]
    %v111 = vpack.c.bf16 %v103, %v103
    %v112 = vpack.c.bf16 %v104, %v104
    %v113 = vpack.c.bf16 %v105, %v105
    %v114 = vpack.c.bf16 %v106, %v106
    %v115 = vpack.c.bf16 %v107, %v107
    %v116 = vpack.c.bf16 %v108, %v108
    %v117 = vpack.c.bf16 %v109, %v109
    %v118 = vpack.c.bf16 %v110, %v110
    %v119 = vld [vmem:[#allocation7] sm:$0xff]
    %v120 = vld [vmem:[#allocation7 + $0x8] sm:$0xff]
    %v121 = vld [vmem:[#allocation7 + $0x10] sm:$0xff]
    %v122 = vld [vmem:[#allocation7 + $0x18] sm:$0xff]
    %v123 = vld [vmem:[#allocation7 + $0x20] sm:$0xff]
    %v124 = vld [vmem:[#allocation7 + $0x28] sm:$0xff]
    %v125 = vld [vmem:[#allocation7 + $0x30] sm:$0xff]
    %v126 = vld [vmem:[#allocation7 + $0x38] sm:$0xff]
    %v127 = vld [vmem:[#allocation8] sm:$0xff]
    %v128 = vld [vmem:[#allocation8 + $0x8] sm:$0xff]
    %v129 = vld [vmem:[#allocation8 + $0x10] sm:$0xff]
    %v130 = vld [vmem:[#allocation8 + $0x18] sm:$0xff]
    %v131 = vld [vmem:[#allocation8 + $0x20] sm:$0xff]
    %v132 = vld [vmem:[#allocation8 + $0x28] sm:$0xff]
    %v133 = vld [vmem:[#allocation8 + $0x30] sm:$0xff]
    %v134 = vld [vmem:[#allocation8 + $0x38] sm:$0xff]
    %v135 = vld [vmem:[#allocation8 + $0x40] sm:$0xff]
    %v136 = vld [vmem:[#allocation8 + $0x48] sm:$0xff]
    %v137 = vld [vmem:[#allocation8 + $0x50] sm:$0xff]
    %v138 = vld [vmem:[#allocation8 + $0x58] sm:$0xff]
    %v139 = vld [vmem:[#allocation8 + $0x60] sm:$0xff]
    %v140 = vld [vmem:[#allocation8 + $0x68] sm:$0xff]
    %v141 = vld [vmem:[#allocation8 + $0x70] sm:$0xff]
    %v142 = vld [vmem:[#allocation8 + $0x78] sm:$0xff]
    %v143 = vld [vmem:[#allocation8 + $0x80] sm:$0xff]
    %v144 = vld [vmem:[#allocation8 + $0x88] sm:$0xff]
    %v145 = vld [vmem:[#allocation8 + $0x90] sm:$0xff]
    %v146 = vld [vmem:[#allocation8 + $0x98] sm:$0xff]
    %v147 = vld [vmem:[#allocation8 + $0xa0] sm:$0xff]
    %v148 = vld [vmem:[#allocation8 + $0xa8] sm:$0xff]
    %v149 = vld [vmem:[#allocation8 + $0xb0] sm:$0xff]
    %v150 = vld [vmem:[#allocation8 + $0xb8] sm:$0xff]
    %v151 = vld [vmem:[#allocation8 + $0xc0] sm:$0xff]
    %v152 = vld [vmem:[#allocation8 + $0xc8] sm:$0xff]
    %v153 = vld [vmem:[#allocation8 + $0xd0] sm:$0xff]
    %v154 = vld [vmem:[#allocation8 + $0xd8] sm:$0xff]
    %v155 = vld [vmem:[#allocation8 + $0xe0] sm:$0xff]
    %v156 = vld [vmem:[#allocation8 + $0xe8] sm:$0xff]
    %v157 = vld [vmem:[#allocation8 + $0xf0] sm:$0xff]
    %v158 = vld [vmem:[#allocation8 + $0xf8] sm:$0xff]
    %v159 = vld [vmem:[#allocation8 + $0x100] sm:$0xff]
    %v160 = vld [vmem:[#allocation8 + $0x108] sm:$0xff]
    %v161 = vld [vmem:[#allocation8 + $0x110] sm:$0xff]
    %v162 = vld [vmem:[#allocation8 + $0x118] sm:$0xff]
    %v163 = vld [vmem:[#allocation8 + $0x120] sm:$0xff]
    %v164 = vld [vmem:[#allocation8 + $0x128] sm:$0xff]
    %v165 = vld [vmem:[#allocation8 + $0x130] sm:$0xff]
    %v166 = vld [vmem:[#allocation8 + $0x138] sm:$0xff]
    %v167 = vld [vmem:[#allocation8 + $0x140] sm:$0xff]
    %v168 = vld [vmem:[#allocation8 + $0x148] sm:$0xff]
    %v169 = vld [vmem:[#allocation8 + $0x150] sm:$0xff]
    %v170 = vld [vmem:[#allocation8 + $0x158] sm:$0xff]
    %v171 = vld [vmem:[#allocation8 + $0x160] sm:$0xff]
    %v172 = vld [vmem:[#allocation8 + $0x168] sm:$0xff]
    %v173 = vld [vmem:[#allocation8 + $0x170] sm:$0xff]
    %v174 = vld [vmem:[#allocation8 + $0x178] sm:$0xff]
    %v175 = vld [vmem:[#allocation8 + $0x180] sm:$0xff]
    %v176 = vld [vmem:[#allocation8 + $0x188] sm:$0xff]
    %v177 = vld [vmem:[#allocation8 + $0x190] sm:$0xff]
    %v178 = vld [vmem:[#allocation8 + $0x198] sm:$0xff]
    %v179 = vld [vmem:[#allocation8 + $0x1a0] sm:$0xff]
    %v180 = vld [vmem:[#allocation8 + $0x1a8] sm:$0xff]
    %v181 = vld [vmem:[#allocation8 + $0x1b0] sm:$0xff]
    %v182 = vld [vmem:[#allocation8 + $0x1b8] sm:$0xff]
    %v183 = vld [vmem:[#allocation8 + $0x1c0] sm:$0xff]
    %v184 = vld [vmem:[#allocation8 + $0x1c8] sm:$0xff]
    %v185 = vld [vmem:[#allocation8 + $0x1d0] sm:$0xff]
    %v186 = vld [vmem:[#allocation8 + $0x1d8] sm:$0xff]
    %v187 = vld [vmem:[#allocation8 + $0x1e0] sm:$0xff]
    %v188 = vld [vmem:[#allocation8 + $0x1e8] sm:$0xff]
    %v189 = vld [vmem:[#allocation8 + $0x1f0] sm:$0xff]
    %v190 = vld [vmem:[#allocation8 + $0x1f8] sm:$0xff]
    %v191 = vld [vmem:[#allocation8 + $0x200] sm:$0xff]
    %v192 = vld [vmem:[#allocation8 + $0x208] sm:$0xff]
    %v193 = vld [vmem:[#allocation8 + $0x210] sm:$0xff]
    %v194 = vld [vmem:[#allocation8 + $0x218] sm:$0xff]
    %v195 = vld [vmem:[#allocation8 + $0x220] sm:$0xff]
    %v196 = vld [vmem:[#allocation8 + $0x228] sm:$0xff]
    %v197 = vld [vmem:[#allocation8 + $0x230] sm:$0xff]
    %v198 = vld [vmem:[#allocation8 + $0x238] sm:$0xff]
    %v199 = vld [vmem:[#allocation8 + $0x240] sm:$0xff]
    %v200 = vld [vmem:[#allocation8 + $0x248] sm:$0xff]
    %v201 = vld [vmem:[#allocation8 + $0x250] sm:$0xff]
    %v202 = vld [vmem:[#allocation8 + $0x258] sm:$0xff]
    %v203 = vld [vmem:[#allocation8 + $0x260] sm:$0xff]
    %v204 = vld [vmem:[#allocation8 + $0x268] sm:$0xff]
    %v205 = vld [vmem:[#allocation8 + $0x270] sm:$0xff]
    %v206 = vld [vmem:[#allocation8 + $0x278] sm:$0xff]
    %v207 = vld [vmem:[#allocation8 + $0x280] sm:$0xff]
    %v208 = vld [vmem:[#allocation8 + $0x288] sm:$0xff]
    %v209 = vld [vmem:[#allocation8 + $0x290] sm:$0xff]
    %v210 = vld [vmem:[#allocation8 + $0x298] sm:$0xff]
    %v211 = vld [vmem:[#allocation8 + $0x2a0] sm:$0xff]
    %v212 = vld [vmem:[#allocation8 + $0x2a8] sm:$0xff]
    %v213 = vld [vmem:[#allocation8 + $0x2b0] sm:$0xff]
    %v214 = vld [vmem:[#allocation8 + $0x2b8] sm:$0xff]
    %v215 = vld [vmem:[#allocation8 + $0x2c0] sm:$0xff]
    %v216 = vld [vmem:[#allocation8 + $0x2c8] sm:$0xff]
    %v217 = vld [vmem:[#allocation8 + $0x2d0] sm:$0xff]
    %v218 = vld [vmem:[#allocation8 + $0x2d8] sm:$0xff]
    %v219 = vld [vmem:[#allocation8 + $0x2e0] sm:$0xff]
    %v220 = vld [vmem:[#allocation8 + $0x2e8] sm:$0xff]
    %v221 = vld [vmem:[#allocation8 + $0x2f0] sm:$0xff]
    %v222 = vld [vmem:[#allocation8 + $0x2f8] sm:$0xff]
    %v223 = vld [vmem:[#allocation8 + $0x300] sm:$0xff]
    %v224 = vld [vmem:[#allocation8 + $0x308] sm:$0xff]
    %v225 = vld [vmem:[#allocation8 + $0x310] sm:$0xff]
    %v226 = vld [vmem:[#allocation8 + $0x318] sm:$0xff]
    %v227 = vld [vmem:[#allocation8 + $0x320] sm:$0xff]
    %v228 = vld [vmem:[#allocation8 + $0x328] sm:$0xff]
    %v229 = vld [vmem:[#allocation8 + $0x330] sm:$0xff]
    %v230 = vld [vmem:[#allocation8 + $0x338] sm:$0xff]
    %v231 = vld [vmem:[#allocation8 + $0x340] sm:$0xff]
    %v232 = vld [vmem:[#allocation8 + $0x348] sm:$0xff]
    %v233 = vld [vmem:[#allocation8 + $0x350] sm:$0xff]
    %v234 = vld [vmem:[#allocation8 + $0x358] sm:$0xff]
    %v235 = vld [vmem:[#allocation8 + $0x360] sm:$0xff]
    %v236 = vld [vmem:[#allocation8 + $0x368] sm:$0xff]
    %v237 = vld [vmem:[#allocation8 + $0x370] sm:$0xff]
    %v238 = vld [vmem:[#allocation8 + $0x378] sm:$0xff]
    %v239 = vld [vmem:[#allocation8 + $0x380] sm:$0xff]
    %v240 = vld [vmem:[#allocation8 + $0x388] sm:$0xff]
    %v241 = vld [vmem:[#allocation8 + $0x390] sm:$0xff]
    %v242 = vld [vmem:[#allocation8 + $0x398] sm:$0xff]
    %v243 = vld [vmem:[#allocation8 + $0x3a0] sm:$0xff]
    %v244 = vld [vmem:[#allocation8 + $0x3a8] sm:$0xff]
    %v245 = vld [vmem:[#allocation8 + $0x3b0] sm:$0xff]
    %v246 = vld [vmem:[#allocation8 + $0x3b8] sm:$0xff]
    %v247 = vld [vmem:[#allocation8 + $0x3c0] sm:$0xff]
    %v248 = vld [vmem:[#allocation8 + $0x3c8] sm:$0xff]
    %v249 = vld [vmem:[#allocation8 + $0x3d0] sm:$0xff]
    %v250 = vld [vmem:[#allocation8 + $0x3d8] sm:$0xff]
    %v251 = vld [vmem:[#allocation8 + $0x3e0] sm:$0xff]
    %v252 = vld [vmem:[#allocation8 + $0x3e8] sm:$0xff]
    %v253 = vld [vmem:[#allocation8 + $0x3f0] sm:$0xff]
    %v254 = vld [vmem:[#allocation8 + $0x3f8] sm:$0xff]
    %v255 = vld [vmem:[#allocation8 + $0x400] sm:$0xff]
    %v256 = vld [vmem:[#allocation8 + $0x408] sm:$0xff]
    %v257 = vld [vmem:[#allocation8 + $0x410] sm:$0xff]
    %v258 = vld [vmem:[#allocation8 + $0x418] sm:$0xff]
    %v259 = vld [vmem:[#allocation8 + $0x420] sm:$0xff]
    %v260 = vld [vmem:[#allocation8 + $0x428] sm:$0xff]
    %v261 = vld [vmem:[#allocation8 + $0x430] sm:$0xff]
    %v262 = vld [vmem:[#allocation8 + $0x438] sm:$0xff]
    %v263 = vld [vmem:[#allocation8 + $0x440] sm:$0xff]
    %v264 = vld [vmem:[#allocation8 + $0x448] sm:$0xff]
    %v265 = vld [vmem:[#allocation8 + $0x450] sm:$0xff]
    %v266 = vld [vmem:[#allocation8 + $0x458] sm:$0xff]
    %v267 = vld [vmem:[#allocation8 + $0x460] sm:$0xff]
    %v268 = vld [vmem:[#allocation8 + $0x468] sm:$0xff]
    %v269 = vld [vmem:[#allocation8 + $0x470] sm:$0xff]
    %v270 = vld [vmem:[#allocation8 + $0x478] sm:$0xff]
    %v271 = vld [vmem:[#allocation8 + $0x480] sm:$0xff]
    %v272 = vld [vmem:[#allocation8 + $0x488] sm:$0xff]
    %v273 = vld [vmem:[#allocation8 + $0x490] sm:$0xff]
    %v274 = vld [vmem:[#allocation8 + $0x498] sm:$0xff]
    %v275 = vld [vmem:[#allocation8 + $0x4a0] sm:$0xff]
    %v276 = vld [vmem:[#allocation8 + $0x4a8] sm:$0xff]
    %v277 = vld [vmem:[#allocation8 + $0x4b0] sm:$0xff]
    %v278 = vld [vmem:[#allocation8 + $0x4b8] sm:$0xff]
    %v279 = vld [vmem:[#allocation8 + $0x4c0] sm:$0xff]
    %v280 = vld [vmem:[#allocation8 + $0x4c8] sm:$0xff]
    %v281 = vld [vmem:[#allocation8 + $0x4d0] sm:$0xff]
    %v282 = vld [vmem:[#allocation8 + $0x4d8] sm:$0xff]
    %v283 = vld [vmem:[#allocation8 + $0x4e0] sm:$0xff]
    %v284 = vld [vmem:[#allocation8 + $0x4e8] sm:$0xff]
    %v285 = vld [vmem:[#allocation8 + $0x4f0] sm:$0xff]
    %v286 = vld [vmem:[#allocation8 + $0x4f8] sm:$0xff]
    %v287 = vld [vmem:[#allocation8 + $0x500] sm:$0xff]
    %v288 = vld [vmem:[#allocation8 + $0x508] sm:$0xff]
    %v289 = vld [vmem:[#allocation8 + $0x510] sm:$0xff]
    %v290 = vld [vmem:[#allocation8 + $0x518] sm:$0xff]
    %v291 = vld [vmem:[#allocation8 + $0x520] sm:$0xff]
    %v292 = vld [vmem:[#allocation8 + $0x528] sm:$0xff]
    %v293 = vld [vmem:[#allocation8 + $0x530] sm:$0xff]
    %v294 = vld [vmem:[#allocation8 + $0x538] sm:$0xff]
    %v295 = vld [vmem:[#allocation8 + $0x540] sm:$0xff]
    %v296 = vld [vmem:[#allocation8 + $0x548] sm:$0xff]
    %v297 = vld [vmem:[#allocation8 + $0x550] sm:$0xff]
    %v298 = vld [vmem:[#allocation8 + $0x558] sm:$0xff]
    %v299 = vld [vmem:[#allocation8 + $0x560] sm:$0xff]
    %v300 = vld [vmem:[#allocation8 + $0x568] sm:$0xff]
    %v301 = vld [vmem:[#allocation8 + $0x570] sm:$0xff]
    %v302 = vld [vmem:[#allocation8 + $0x578] sm:$0xff]
    %v303 = vld [vmem:[#allocation8 + $0x580] sm:$0xff]
    %v304 = vld [vmem:[#allocation8 + $0x588] sm:$0xff]
    %v305 = vld [vmem:[#allocation8 + $0x590] sm:$0xff]
    %v306 = vld [vmem:[#allocation8 + $0x598] sm:$0xff]
    %v307 = vld [vmem:[#allocation8 + $0x5a0] sm:$0xff]
    %v308 = vld [vmem:[#allocation8 + $0x5a8] sm:$0xff]
    %v309 = vld [vmem:[#allocation8 + $0x5b0] sm:$0xff]
    %v310 = vld [vmem:[#allocation8 + $0x5b8] sm:$0xff]
    %v311 = vld [vmem:[#allocation8 + $0x5c0] sm:$0xff]
    %v312 = vld [vmem:[#allocation8 + $0x5c8] sm:$0xff]
    %v313 = vld [vmem:[#allocation8 + $0x5d0] sm:$0xff]
    %v314 = vld [vmem:[#allocation8 + $0x5d8] sm:$0xff]
    %v315 = vld [vmem:[#allocation8 + $0x5e0] sm:$0xff]
    %v316 = vld [vmem:[#allocation8 + $0x5e8] sm:$0xff]
    %v317 = vld [vmem:[#allocation8 + $0x5f0] sm:$0xff]
    %v318 = vld [vmem:[#allocation8 + $0x5f8] sm:$0xff]
    %v319 = vld [vmem:[#allocation8 + $0x600] sm:$0xff]
    %v320 = vld [vmem:[#allocation8 + $0x608] sm:$0xff]
    %v321 = vld [vmem:[#allocation8 + $0x610] sm:$0xff]
    %v322 = vld [vmem:[#allocation8 + $0x618] sm:$0xff]
    %v323 = vld [vmem:[#allocation8 + $0x620] sm:$0xff]
    %v324 = vld [vmem:[#allocation8 + $0x628] sm:$0xff]
    %v325 = vld [vmem:[#allocation8 + $0x630] sm:$0xff]
    %v326 = vld [vmem:[#allocation8 + $0x638] sm:$0xff]
    %v327 = vld [vmem:[#allocation8 + $0x640] sm:$0xff]
    %v328 = vld [vmem:[#allocation8 + $0x648] sm:$0xff]
    %v329 = vld [vmem:[#allocation8 + $0x650] sm:$0xff]
    %v330 = vld [vmem:[#allocation8 + $0x658] sm:$0xff]
    %v331 = vld [vmem:[#allocation8 + $0x660] sm:$0xff]
    %v332 = vld [vmem:[#allocation8 + $0x668] sm:$0xff]
    %v333 = vld [vmem:[#allocation8 + $0x670] sm:$0xff]
    %v334 = vld [vmem:[#allocation8 + $0x678] sm:$0xff]
    %v335 = vld [vmem:[#allocation8 + $0x680] sm:$0xff]
    %v336 = vld [vmem:[#allocation8 + $0x688] sm:$0xff]
    %v337 = vld [vmem:[#allocation8 + $0x690] sm:$0xff]
    %v338 = vld [vmem:[#allocation8 + $0x698] sm:$0xff]
    %v339 = vld [vmem:[#allocation8 + $0x6a0] sm:$0xff]
    %v340 = vld [vmem:[#allocation8 + $0x6a8] sm:$0xff]
    %v341 = vld [vmem:[#allocation8 + $0x6b0] sm:$0xff]
    %v342 = vld [vmem:[#allocation8 + $0x6b8] sm:$0xff]
    %v343 = vld [vmem:[#allocation8 + $0x6c0] sm:$0xff]
    %v344 = vld [vmem:[#allocation8 + $0x6c8] sm:$0xff]
    %v345 = vld [vmem:[#allocation8 + $0x6d0] sm:$0xff]
    %v346 = vld [vmem:[#allocation8 + $0x6d8] sm:$0xff]
    %v347 = vld [vmem:[#allocation8 + $0x6e0] sm:$0xff]
    %v348 = vld [vmem:[#allocation8 + $0x6e8] sm:$0xff]
    %v349 = vld [vmem:[#allocation8 + $0x6f0] sm:$0xff]
    %v350 = vld [vmem:[#allocation8 + $0x6f8] sm:$0xff]
    %v351 = vld [vmem:[#allocation8 + $0x700] sm:$0xff]
    %v352 = vld [vmem:[#allocation8 + $0x708] sm:$0xff]
    %v353 = vld [vmem:[#allocation8 + $0x710] sm:$0xff]
    %v354 = vld [vmem:[#allocation8 + $0x718] sm:$0xff]
    %v355 = vld [vmem:[#allocation8 + $0x720] sm:$0xff]
    %v356 = vld [vmem:[#allocation8 + $0x728] sm:$0xff]
    %v357 = vld [vmem:[#allocation8 + $0x730] sm:$0xff]
    %v358 = vld [vmem:[#allocation8 + $0x738] sm:$0xff]
    %v359 = vld [vmem:[#allocation8 + $0x740] sm:$0xff]
    %v360 = vld [vmem:[#allocation8 + $0x748] sm:$0xff]
    %v361 = vld [vmem:[#allocation8 + $0x750] sm:$0xff]
    %v362 = vld [vmem:[#allocation8 + $0x758] sm:$0xff]
    %v363 = vld [vmem:[#allocation8 + $0x760] sm:$0xff]
    %v364 = vld [vmem:[#allocation8 + $0x768] sm:$0xff]
    %v365 = vld [vmem:[#allocation8 + $0x770] sm:$0xff]
    %v366 = vld [vmem:[#allocation8 + $0x778] sm:$0xff]
    %v367 = vld [vmem:[#allocation8 + $0x780] sm:$0xff]
    %v368 = vld [vmem:[#allocation8 + $0x788] sm:$0xff]
    %v369 = vld [vmem:[#allocation8 + $0x790] sm:$0xff]
    %v370 = vld [vmem:[#allocation8 + $0x798] sm:$0xff]
    %v371 = vld [vmem:[#allocation8 + $0x7a0] sm:$0xff]
    %v372 = vld [vmem:[#allocation8 + $0x7a8] sm:$0xff]
    %v373 = vld [vmem:[#allocation8 + $0x7b0] sm:$0xff]
    %v374 = vld [vmem:[#allocation8 + $0x7b8] sm:$0xff]
    %v375 = vld [vmem:[#allocation8 + $0x7c0] sm:$0xff]
    %v376 = vld [vmem:[#allocation8 + $0x7c8] sm:$0xff]
    %v377 = vld [vmem:[#allocation8 + $0x7d0] sm:$0xff]
    %v378 = vld [vmem:[#allocation8 + $0x7d8] sm:$0xff]
    %v379 = vld [vmem:[#allocation8 + $0x7e0] sm:$0xff]
    %v380 = vld [vmem:[#allocation8 + $0x7e8] sm:$0xff]
    %v381 = vld [vmem:[#allocation8 + $0x7f0] sm:$0xff]
    %v382 = vld [vmem:[#allocation8 + $0x7f8] sm:$0xff]
    %v639 = vunpack.c.l.b16 %v127
    %v640 = vunpack.c.h.b16 %v127
    %v641 = vunpack.c.l.b16 %v128
    %v642 = vunpack.c.h.b16 %v128
    %v643 = vunpack.c.l.b16 %v129
    %v644 = vunpack.c.h.b16 %v129
    %v645 = vunpack.c.l.b16 %v130
    %v646 = vunpack.c.h.b16 %v130
    %v647 = vunpack.c.l.b16 %v131
    %v648 = vunpack.c.h.b16 %v131
    %v649 = vunpack.c.l.b16 %v132
    %v650 = vunpack.c.h.b16 %v132
    %v651 = vunpack.c.l.b16 %v133
    %v652 = vunpack.c.h.b16 %v133
    %v653 = vunpack.c.l.b16 %v134
    %v654 = vunpack.c.h.b16 %v134
    %v655 = vunpack.c.l.b16 %v135
    %v656 = vunpack.c.h.b16 %v135
    %v657 = vunpack.c.l.b16 %v136
    %v658 = vunpack.c.h.b16 %v136
    %v659 = vunpack.c.l.b16 %v137
    %v660 = vunpack.c.h.b16 %v137
    %v661 = vunpack.c.l.b16 %v138
    %v662 = vunpack.c.h.b16 %v138
    %v663 = vunpack.c.l.b16 %v139
    %v664 = vunpack.c.h.b16 %v139
    %v665 = vunpack.c.l.b16 %v140
    %v666 = vunpack.c.h.b16 %v140
    %v667 = vunpack.c.l.b16 %v141
    %v668 = vunpack.c.h.b16 %v141
    %v669 = vunpack.c.l.b16 %v142
    %v670 = vunpack.c.h.b16 %v142
    %v671 = vunpack.c.l.b16 %v143
    %v672 = vunpack.c.h.b16 %v143
    %v673 = vunpack.c.l.b16 %v144
    %v674 = vunpack.c.h.b16 %v144
    %v675 = vunpack.c.l.b16 %v145
    %v676 = vunpack.c.h.b16 %v145
    %v677 = vunpack.c.l.b16 %v146
    %v678 = vunpack.c.h.b16 %v146
    %v679 = vunpack.c.l.b16 %v147
    %v680 = vunpack.c.h.b16 %v147
    %v681 = vunpack.c.l.b16 %v148
    %v682 = vunpack.c.h.b16 %v148
    %v683 = vunpack.c.l.b16 %v149
    %v684 = vunpack.c.h.b16 %v149
    %v685 = vunpack.c.l.b16 %v150
    %v686 = vunpack.c.h.b16 %v150
    %v687 = vunpack.c.l.b16 %v151
    %v688 = vunpack.c.h.b16 %v151
    %v689 = vunpack.c.l.b16 %v152
    %v690 = vunpack.c.h.b16 %v152
    %v691 = vunpack.c.l.b16 %v153
    %v692 = vunpack.c.h.b16 %v153
    %v693 = vunpack.c.l.b16 %v154
    %v694 = vunpack.c.h.b16 %v154
    %v695 = vunpack.c.l.b16 %v155
    %v696 = vunpack.c.h.b16 %v155
    %v697 = vunpack.c.l.b16 %v156
    %v698 = vunpack.c.h.b16 %v156
    %v699 = vunpack.c.l.b16 %v157
    %v700 = vunpack.c.h.b16 %v157
    %v701 = vunpack.c.l.b16 %v158
    %v702 = vunpack.c.h.b16 %v158
    %v703 = vunpack.c.l.b16 %v159
    %v704 = vunpack.c.h.b16 %v159
    %v705 = vunpack.c.l.b16 %v160
    %v706 = vunpack.c.h.b16 %v160
    %v707 = vunpack.c.l.b16 %v161
    %v708 = vunpack.c.h.b16 %v161
    %v709 = vunpack.c.l.b16 %v162
    %v710 = vunpack.c.h.b16 %v162
    %v711 = vunpack.c.l.b16 %v163
    %v712 = vunpack.c.h.b16 %v163
    %v713 = vunpack.c.l.b16 %v164
    %v714 = vunpack.c.h.b16 %v164
    %v715 = vunpack.c.l.b16 %v165
    %v716 = vunpack.c.h.b16 %v165
    %v717 = vunpack.c.l.b16 %v166
    %v718 = vunpack.c.h.b16 %v166
    %v719 = vunpack.c.l.b16 %v167
    %v720 = vunpack.c.h.b16 %v167
    %v721 = vunpack.c.l.b16 %v168
    %v722 = vunpack.c.h.b16 %v168
    %v723 = vunpack.c.l.b16 %v169
    %v724 = vunpack.c.h.b16 %v169
    %v725 = vunpack.c.l.b16 %v170
    %v726 = vunpack.c.h.b16 %v170
    %v727 = vunpack.c.l.b16 %v171
    %v728 = vunpack.c.h.b16 %v171
    %v729 = vunpack.c.l.b16 %v172
    %v730 = vunpack.c.h.b16 %v172
    %v731 = vunpack.c.l.b16 %v173
    %v732 = vunpack.c.h.b16 %v173
    %v733 = vunpack.c.l.b16 %v174
    %v734 = vunpack.c.h.b16 %v174
    %v735 = vunpack.c.l.b16 %v175
    %v736 = vunpack.c.h.b16 %v175
    %v737 = vunpack.c.l.b16 %v176
    %v738 = vunpack.c.h.b16 %v176
    %v739 = vunpack.c.l.b16 %v177
    %v740 = vunpack.c.h.b16 %v177
    %v741 = vunpack.c.l.b16 %v178
    %v742 = vunpack.c.h.b16 %v178
    %v743 = vunpack.c.l.b16 %v179
    %v744 = vunpack.c.h.b16 %v179
    %v745 = vunpack.c.l.b16 %v180
    %v746 = vunpack.c.h.b16 %v180
    %v747 = vunpack.c.l.b16 %v181
    %v748 = vunpack.c.h.b16 %v181
    %v749 = vunpack.c.l.b16 %v182
    %v750 = vunpack.c.h.b16 %v182
    %v751 = vunpack.c.l.b16 %v183
    %v752 = vunpack.c.h.b16 %v183
    %v753 = vunpack.c.l.b16 %v184
    %v754 = vunpack.c.h.b16 %v184
    %v755 = vunpack.c.l.b16 %v185
    %v756 = vunpack.c.h.b16 %v185
    %v757 = vunpack.c.l.b16 %v186
    %v758 = vunpack.c.h.b16 %v186
    %v759 = vunpack.c.l.b16 %v187
    %v760 = vunpack.c.h.b16 %v187
    %v761 = vunpack.c.l.b16 %v188
    %v762 = vunpack.c.h.b16 %v188
    %v763 = vunpack.c.l.b16 %v189
    %v764 = vunpack.c.h.b16 %v189
    %v765 = vunpack.c.l.b16 %v190
    %v766 = vunpack.c.h.b16 %v190
    %v767 = vunpack.c.l.b16 %v191
    %v768 = vunpack.c.h.b16 %v191
    %v769 = vunpack.c.l.b16 %v192
    %v770 = vunpack.c.h.b16 %v192
    %v771 = vunpack.c.l.b16 %v193
    %v772 = vunpack.c.h.b16 %v193
    %v773 = vunpack.c.l.b16 %v194
    %v774 = vunpack.c.h.b16 %v194
    %v775 = vunpack.c.l.b16 %v195
    %v776 = vunpack.c.h.b16 %v195
    %v777 = vunpack.c.l.b16 %v196
    %v778 = vunpack.c.h.b16 %v196
    %v779 = vunpack.c.l.b16 %v197
    %v780 = vunpack.c.h.b16 %v197
    %v781 = vunpack.c.l.b16 %v198
    %v782 = vunpack.c.h.b16 %v198
    %v783 = vunpack.c.l.b16 %v199
    %v784 = vunpack.c.h.b16 %v199
    %v785 = vunpack.c.l.b16 %v200
    %v786 = vunpack.c.h.b16 %v200
    %v787 = vunpack.c.l.b16 %v201
    %v788 = vunpack.c.h.b16 %v201
    %v789 = vunpack.c.l.b16 %v202
    %v790 = vunpack.c.h.b16 %v202
    %v791 = vunpack.c.l.b16 %v203
    %v792 = vunpack.c.h.b16 %v203
    %v793 = vunpack.c.l.b16 %v204
    %v794 = vunpack.c.h.b16 %v204
    %v795 = vunpack.c.l.b16 %v205
    %v796 = vunpack.c.h.b16 %v205
    %v797 = vunpack.c.l.b16 %v206
    %v798 = vunpack.c.h.b16 %v206
    %v799 = vunpack.c.l.b16 %v207
    %v800 = vunpack.c.h.b16 %v207
    %v801 = vunpack.c.l.b16 %v208
    %v802 = vunpack.c.h.b16 %v208
    %v803 = vunpack.c.l.b16 %v209
    %v804 = vunpack.c.h.b16 %v209
    %v805 = vunpack.c.l.b16 %v210
    %v806 = vunpack.c.h.b16 %v210
    %v807 = vunpack.c.l.b16 %v211
    %v808 = vunpack.c.h.b16 %v211
    %v809 = vunpack.c.l.b16 %v212
    %v810 = vunpack.c.h.b16 %v212
    %v811 = vunpack.c.l.b16 %v213
    %v812 = vunpack.c.h.b16 %v213
    %v813 = vunpack.c.l.b16 %v214
    %v814 = vunpack.c.h.b16 %v214
    %v815 = vunpack.c.l.b16 %v215
    %v816 = vunpack.c.h.b16 %v215
    %v817 = vunpack.c.l.b16 %v216
    %v818 = vunpack.c.h.b16 %v216
    %v819 = vunpack.c.l.b16 %v217
    %v820 = vunpack.c.h.b16 %v217
    %v821 = vunpack.c.l.b16 %v218
    %v822 = vunpack.c.h.b16 %v218
    %v823 = vunpack.c.l.b16 %v219
    %v824 = vunpack.c.h.b16 %v219
    %v825 = vunpack.c.l.b16 %v220
    %v826 = vunpack.c.h.b16 %v220
    %v827 = vunpack.c.l.b16 %v221
    %v828 = vunpack.c.h.b16 %v221
    %v829 = vunpack.c.l.b16 %v222
    %v830 = vunpack.c.h.b16 %v222
    %v831 = vunpack.c.l.b16 %v223
    %v832 = vunpack.c.h.b16 %v223
    %v833 = vunpack.c.l.b16 %v224
    %v834 = vunpack.c.h.b16 %v224
    %v835 = vunpack.c.l.b16 %v225
    %v836 = vunpack.c.h.b16 %v225
    %v837 = vunpack.c.l.b16 %v226
    %v838 = vunpack.c.h.b16 %v226
    %v839 = vunpack.c.l.b16 %v227
    %v840 = vunpack.c.h.b16 %v227
    %v841 = vunpack.c.l.b16 %v228
    %v842 = vunpack.c.h.b16 %v228
    %v843 = vunpack.c.l.b16 %v229
    %v844 = vunpack.c.h.b16 %v229
    %v845 = vunpack.c.l.b16 %v230
    %v846 = vunpack.c.h.b16 %v230
    %v847 = vunpack.c.l.b16 %v231
    %v848 = vunpack.c.h.b16 %v231
    %v849 = vunpack.c.l.b16 %v232
    %v850 = vunpack.c.h.b16 %v232
    %v851 = vunpack.c.l.b16 %v233
    %v852 = vunpack.c.h.b16 %v233
    %v853 = vunpack.c.l.b16 %v234
    %v854 = vunpack.c.h.b16 %v234
    %v855 = vunpack.c.l.b16 %v235
    %v856 = vunpack.c.h.b16 %v235
    %v857 = vunpack.c.l.b16 %v236
    %v858 = vunpack.c.h.b16 %v236
    %v859 = vunpack.c.l.b16 %v237
    %v860 = vunpack.c.h.b16 %v237
    %v861 = vunpack.c.l.b16 %v238
    %v862 = vunpack.c.h.b16 %v238
    %v863 = vunpack.c.l.b16 %v239
    %v864 = vunpack.c.h.b16 %v239
    %v865 = vunpack.c.l.b16 %v240
    %v866 = vunpack.c.h.b16 %v240
    %v867 = vunpack.c.l.b16 %v241
    %v868 = vunpack.c.h.b16 %v241
    %v869 = vunpack.c.l.b16 %v242
    %v870 = vunpack.c.h.b16 %v242
    %v871 = vunpack.c.l.b16 %v243
    %v872 = vunpack.c.h.b16 %v243
    %v873 = vunpack.c.l.b16 %v244
    %v874 = vunpack.c.h.b16 %v244
    %v875 = vunpack.c.l.b16 %v245
    %v876 = vunpack.c.h.b16 %v245
    %v877 = vunpack.c.l.b16 %v246
    %v878 = vunpack.c.h.b16 %v246
    %v879 = vunpack.c.l.b16 %v247
    %v880 = vunpack.c.h.b16 %v247
    %v881 = vunpack.c.l.b16 %v248
    %v882 = vunpack.c.h.b16 %v248
    %v883 = vunpack.c.l.b16 %v249
    %v884 = vunpack.c.h.b16 %v249
    %v885 = vunpack.c.l.b16 %v250
    %v886 = vunpack.c.h.b16 %v250
    %v887 = vunpack.c.l.b16 %v251
    %v888 = vunpack.c.h.b16 %v251
    %v889 = vunpack.c.l.b16 %v252
    %v890 = vunpack.c.h.b16 %v252
    %v891 = vunpack.c.l.b16 %v253
    %v892 = vunpack.c.h.b16 %v253
    %v893 = vunpack.c.l.b16 %v254
    %v894 = vunpack.c.h.b16 %v254
    %v895 = vunpack.c.l.b16 %v255
    %v896 = vunpack.c.h.b16 %v255
    %v897 = vunpack.c.l.b16 %v256
    %v898 = vunpack.c.h.b16 %v256
    %v899 = vunpack.c.l.b16 %v257
    %v900 = vunpack.c.h.b16 %v257
    %v901 = vunpack.c.l.b16 %v258
    %v902 = vunpack.c.h.b16 %v258
    %v903 = vunpack.c.l.b16 %v259
    %v904 = vunpack.c.h.b16 %v259
    %v905 = vunpack.c.l.b16 %v260
    %v906 = vunpack.c.h.b16 %v260
    %v907 = vunpack.c.l.b16 %v261
    %v908 = vunpack.c.h.b16 %v261
    %v909 = vunpack.c.l.b16 %v262
    %v910 = vunpack.c.h.b16 %v262
    %v911 = vunpack.c.l.b16 %v263
    %v912 = vunpack.c.h.b16 %v263
    %v913 = vunpack.c.l.b16 %v264
    %v914 = vunpack.c.h.b16 %v264
    %v915 = vunpack.c.l.b16 %v265
    %v916 = vunpack.c.h.b16 %v265
    %v917 = vunpack.c.l.b16 %v266
    %v918 = vunpack.c.h.b16 %v266
    %v919 = vunpack.c.l.b16 %v267
    %v920 = vunpack.c.h.b16 %v267
    %v921 = vunpack.c.l.b16 %v268
    %v922 = vunpack.c.h.b16 %v268
    %v923 = vunpack.c.l.b16 %v269
    %v924 = vunpack.c.h.b16 %v269
    %v925 = vunpack.c.l.b16 %v270
    %v926 = vunpack.c.h.b16 %v270
    %v927 = vunpack.c.l.b16 %v271
    %v928 = vunpack.c.h.b16 %v271
    %v929 = vunpack.c.l.b16 %v272
    %v930 = vunpack.c.h.b16 %v272
    %v931 = vunpack.c.l.b16 %v273
    %v932 = vunpack.c.h.b16 %v273
    %v933 = vunpack.c.l.b16 %v274
    %v934 = vunpack.c.h.b16 %v274
    %v935 = vunpack.c.l.b16 %v275
    %v936 = vunpack.c.h.b16 %v275
    %v937 = vunpack.c.l.b16 %v276
    %v938 = vunpack.c.h.b16 %v276
    %v939 = vunpack.c.l.b16 %v277
    %v940 = vunpack.c.h.b16 %v277
    %v941 = vunpack.c.l.b16 %v278
    %v942 = vunpack.c.h.b16 %v278
    %v943 = vunpack.c.l.b16 %v279
    %v944 = vunpack.c.h.b16 %v279
    %v945 = vunpack.c.l.b16 %v280
    %v946 = vunpack.c.h.b16 %v280
    %v947 = vunpack.c.l.b16 %v281
    %v948 = vunpack.c.h.b16 %v281
    %v949 = vunpack.c.l.b16 %v282
    %v950 = vunpack.c.h.b16 %v282
    %v951 = vunpack.c.l.b16 %v283
    %v952 = vunpack.c.h.b16 %v283
    %v953 = vunpack.c.l.b16 %v284
    %v954 = vunpack.c.h.b16 %v284
    %v955 = vunpack.c.l.b16 %v285
    %v956 = vunpack.c.h.b16 %v285
    %v957 = vunpack.c.l.b16 %v286
    %v958 = vunpack.c.h.b16 %v286
    %v959 = vunpack.c.l.b16 %v287
    %v960 = vunpack.c.h.b16 %v287
    %v961 = vunpack.c.l.b16 %v288
    %v962 = vunpack.c.h.b16 %v288
    %v963 = vunpack.c.l.b16 %v289
    %v964 = vunpack.c.h.b16 %v289
    %v965 = vunpack.c.l.b16 %v290
    %v966 = vunpack.c.h.b16 %v290
    %v967 = vunpack.c.l.b16 %v291
    %v968 = vunpack.c.h.b16 %v291
    %v969 = vunpack.c.l.b16 %v292
    %v970 = vunpack.c.h.b16 %v292
    %v971 = vunpack.c.l.b16 %v293
    %v972 = vunpack.c.h.b16 %v293
    %v973 = vunpack.c.l.b16 %v294
    %v974 = vunpack.c.h.b16 %v294
    %v975 = vunpack.c.l.b16 %v295
    %v976 = vunpack.c.h.b16 %v295
    %v977 = vunpack.c.l.b16 %v296
    %v978 = vunpack.c.h.b16 %v296
    %v979 = vunpack.c.l.b16 %v297
    %v980 = vunpack.c.h.b16 %v297
    %v981 = vunpack.c.l.b16 %v298
    %v982 = vunpack.c.h.b16 %v298
    %v983 = vunpack.c.l.b16 %v299
    %v984 = vunpack.c.h.b16 %v299
    %v985 = vunpack.c.l.b16 %v300
    %v986 = vunpack.c.h.b16 %v300
    %v987 = vunpack.c.l.b16 %v301
    %v988 = vunpack.c.h.b16 %v301
    %v989 = vunpack.c.l.b16 %v302
    %v990 = vunpack.c.h.b16 %v302
    %v991 = vunpack.c.l.b16 %v303
    %v992 = vunpack.c.h.b16 %v303
    %v993 = vunpack.c.l.b16 %v304
    %v994 = vunpack.c.h.b16 %v304
    %v995 = vunpack.c.l.b16 %v305
    %v996 = vunpack.c.h.b16 %v305
    %v997 = vunpack.c.l.b16 %v306
    %v998 = vunpack.c.h.b16 %v306
    %v999 = vunpack.c.l.b16 %v307
    %v1000 = vunpack.c.h.b16 %v307
    %v1001 = vunpack.c.l.b16 %v308
    %v1002 = vunpack.c.h.b16 %v308
    %v1003 = vunpack.c.l.b16 %v309
    %v1004 = vunpack.c.h.b16 %v309
    %v1005 = vunpack.c.l.b16 %v310
    %v1006 = vunpack.c.h.b16 %v310
    %v1007 = vunpack.c.l.b16 %v311
    %v1008 = vunpack.c.h.b16 %v311
    %v1009 = vunpack.c.l.b16 %v312
    %v1010 = vunpack.c.h.b16 %v312
    %v1011 = vunpack.c.l.b16 %v313
    %v1012 = vunpack.c.h.b16 %v313
    %v1013 = vunpack.c.l.b16 %v314
    %v1014 = vunpack.c.h.b16 %v314
    %v1015 = vunpack.c.l.b16 %v315
    %v1016 = vunpack.c.h.b16 %v315
    %v1017 = vunpack.c.l.b16 %v316
    %v1018 = vunpack.c.h.b16 %v316
    %v1019 = vunpack.c.l.b16 %v317
    %v1020 = vunpack.c.h.b16 %v317
    %v1021 = vunpack.c.l.b16 %v318
    %v1022 = vunpack.c.h.b16 %v318
    %v1023 = vunpack.c.l.b16 %v319
    %v1024 = vunpack.c.h.b16 %v319
    %v1025 = vunpack.c.l.b16 %v320
    %v1026 = vunpack.c.h.b16 %v320
    %v1027 = vunpack.c.l.b16 %v321
    %v1028 = vunpack.c.h.b16 %v321
    %v1029 = vunpack.c.l.b16 %v322
    %v1030 = vunpack.c.h.b16 %v322
    %v1031 = vunpack.c.l.b16 %v323
    %v1032 = vunpack.c.h.b16 %v323
    %v1033 = vunpack.c.l.b16 %v324
    %v1034 = vunpack.c.h.b16 %v324
    %v1035 = vunpack.c.l.b16 %v325
    %v1036 = vunpack.c.h.b16 %v325
    %v1037 = vunpack.c.l.b16 %v326
    %v1038 = vunpack.c.h.b16 %v326
    %v1039 = vunpack.c.l.b16 %v327
    %v1040 = vunpack.c.h.b16 %v327
    %v1041 = vunpack.c.l.b16 %v328
    %v1042 = vunpack.c.h.b16 %v328
    %v1043 = vunpack.c.l.b16 %v329
    %v1044 = vunpack.c.h.b16 %v329
    %v1045 = vunpack.c.l.b16 %v330
    %v1046 = vunpack.c.h.b16 %v330
    %v1047 = vunpack.c.l.b16 %v331
    %v1048 = vunpack.c.h.b16 %v331
    %v1049 = vunpack.c.l.b16 %v332
    %v1050 = vunpack.c.h.b16 %v332
    %v1051 = vunpack.c.l.b16 %v333
    %v1052 = vunpack.c.h.b16 %v333
    %v1053 = vunpack.c.l.b16 %v334
    %v1054 = vunpack.c.h.b16 %v334
    %v1055 = vunpack.c.l.b16 %v335
    %v1056 = vunpack.c.h.b16 %v335
    %v1057 = vunpack.c.l.b16 %v336
    %v1058 = vunpack.c.h.b16 %v336
    %v1059 = vunpack.c.l.b16 %v337
    %v1060 = vunpack.c.h.b16 %v337
    %v1061 = vunpack.c.l.b16 %v338
    %v1062 = vunpack.c.h.b16 %v338
    %v1063 = vunpack.c.l.b16 %v339
    %v1064 = vunpack.c.h.b16 %v339
    %v1065 = vunpack.c.l.b16 %v340
    %v1066 = vunpack.c.h.b16 %v340
    %v1067 = vunpack.c.l.b16 %v341
    %v1068 = vunpack.c.h.b16 %v341
    %v1069 = vunpack.c.l.b16 %v342
    %v1070 = vunpack.c.h.b16 %v342
    %v1071 = vunpack.c.l.b16 %v343
    %v1072 = vunpack.c.h.b16 %v343
    %v1073 = vunpack.c.l.b16 %v344
    %v1074 = vunpack.c.h.b16 %v344
    %v1075 = vunpack.c.l.b16 %v345
    %v1076 = vunpack.c.h.b16 %v345
    %v1077 = vunpack.c.l.b16 %v346
    %v1078 = vunpack.c.h.b16 %v346
    %v1079 = vunpack.c.l.b16 %v347
    %v1080 = vunpack.c.h.b16 %v347
    %v1081 = vunpack.c.l.b16 %v348
    %v1082 = vunpack.c.h.b16 %v348
    %v1083 = vunpack.c.l.b16 %v349
    %v1084 = vunpack.c.h.b16 %v349
    %v1085 = vunpack.c.l.b16 %v350
    %v1086 = vunpack.c.h.b16 %v350
    %v1087 = vunpack.c.l.b16 %v351
    %v1088 = vunpack.c.h.b16 %v351
    %v1089 = vunpack.c.l.b16 %v352
    %v1090 = vunpack.c.h.b16 %v352
    %v1091 = vunpack.c.l.b16 %v353
    %v1092 = vunpack.c.h.b16 %v353
    %v1093 = vunpack.c.l.b16 %v354
    %v1094 = vunpack.c.h.b16 %v354
    %v1095 = vunpack.c.l.b16 %v355
    %v1096 = vunpack.c.h.b16 %v355
    %v1097 = vunpack.c.l.b16 %v356
    %v1098 = vunpack.c.h.b16 %v356
    %v1099 = vunpack.c.l.b16 %v357
    %v1100 = vunpack.c.h.b16 %v357
    %v1101 = vunpack.c.l.b16 %v358
    %v1102 = vunpack.c.h.b16 %v358
    %v1103 = vunpack.c.l.b16 %v359
    %v1104 = vunpack.c.h.b16 %v359
    %v1105 = vunpack.c.l.b16 %v360
    %v1106 = vunpack.c.h.b16 %v360
    %v1107 = vunpack.c.l.b16 %v361
    %v1108 = vunpack.c.h.b16 %v361
    %v1109 = vunpack.c.l.b16 %v362
    %v1110 = vunpack.c.h.b16 %v362
    %v1111 = vunpack.c.l.b16 %v363
    %v1112 = vunpack.c.h.b16 %v363
    %v1113 = vunpack.c.l.b16 %v364
    %v1114 = vunpack.c.h.b16 %v364
    %v1115 = vunpack.c.l.b16 %v365
    %v1116 = vunpack.c.h.b16 %v365
    %v1117 = vunpack.c.l.b16 %v366
    %v1118 = vunpack.c.h.b16 %v366
    %v1119 = vunpack.c.l.b16 %v367
    %v1120 = vunpack.c.h.b16 %v367
    %v1121 = vunpack.c.l.b16 %v368
    %v1122 = vunpack.c.h.b16 %v368
    %v1123 = vunpack.c.l.b16 %v369
    %v1124 = vunpack.c.h.b16 %v369
    %v1125 = vunpack.c.l.b16 %v370
    %v1126 = vunpack.c.h.b16 %v370
    %v1127 = vunpack.c.l.b16 %v371
    %v1128 = vunpack.c.h.b16 %v371
    %v1129 = vunpack.c.l.b16 %v372
    %v1130 = vunpack.c.h.b16 %v372
    %v1131 = vunpack.c.l.b16 %v373
    %v1132 = vunpack.c.h.b16 %v373
    %v1133 = vunpack.c.l.b16 %v374
    %v1134 = vunpack.c.h.b16 %v374
    %v1135 = vunpack.c.l.b16 %v375
    %v1136 = vunpack.c.h.b16 %v375
    %v1137 = vunpack.c.l.b16 %v376
    %v1138 = vunpack.c.h.b16 %v376
    %v1139 = vunpack.c.l.b16 %v377
    %v1140 = vunpack.c.h.b16 %v377
    %v1141 = vunpack.c.l.b16 %v378
    %v1142 = vunpack.c.h.b16 %v378
    %v1143 = vunpack.c.l.b16 %v379
    %v1144 = vunpack.c.h.b16 %v379
    %v1145 = vunpack.c.l.b16 %v380
    %v1146 = vunpack.c.h.b16 %v380
    %v1147 = vunpack.c.l.b16 %v381
    %v1148 = vunpack.c.h.b16 %v381
    %v1149 = vunpack.c.l.b16 %v382
    %v1150 = vunpack.c.h.b16 %v382
    %v1151 = vpack.c.b16 %v643, %v639
    %v1152 = vpack.c.b16 %v644, %v640
    %v1153 = vpack.c.b16 %v645, %v641
    %v1154 = vpack.c.b16 %v646, %v642
    %v1155 = vpack.c.b16 %v651, %v647
    %v1156 = vpack.c.b16 %v652, %v648
    %v1157 = vpack.c.b16 %v653, %v649
    %v1158 = vpack.c.b16 %v654, %v650
    %v1159 = vpack.c.b16 %v659, %v655
    %v1160 = vpack.c.b16 %v660, %v656
    %v1161 = vpack.c.b16 %v661, %v657
    %v1162 = vpack.c.b16 %v662, %v658
    %v1163 = vpack.c.b16 %v667, %v663
    %v1164 = vpack.c.b16 %v668, %v664
    %v1165 = vpack.c.b16 %v669, %v665
    %v1166 = vpack.c.b16 %v670, %v666
    %v1167 = vpack.c.b16 %v675, %v671
    %v1168 = vpack.c.b16 %v676, %v672
    %v1169 = vpack.c.b16 %v677, %v673
    %v1170 = vpack.c.b16 %v678, %v674
    %v1171 = vpack.c.b16 %v683, %v679
    %v1172 = vpack.c.b16 %v684, %v680
    %v1173 = vpack.c.b16 %v685, %v681
    %v1174 = vpack.c.b16 %v686, %v682
    %v1175 = vpack.c.b16 %v691, %v687
    %v1176 = vpack.c.b16 %v692, %v688
    %v1177 = vpack.c.b16 %v693, %v689
    %v1178 = vpack.c.b16 %v694, %v690
    %v1179 = vpack.c.b16 %v699, %v695
    %v1180 = vpack.c.b16 %v700, %v696
    %v1181 = vpack.c.b16 %v701, %v697
    %v1182 = vpack.c.b16 %v702, %v698
    %v1183 = vpack.c.b16 %v707, %v703
    %v1184 = vpack.c.b16 %v708, %v704
    %v1185 = vpack.c.b16 %v709, %v705
    %v1186 = vpack.c.b16 %v710, %v706
    %v1187 = vpack.c.b16 %v715, %v711
    %v1188 = vpack.c.b16 %v716, %v712
    %v1189 = vpack.c.b16 %v717, %v713
    %v1190 = vpack.c.b16 %v718, %v714
    %v1191 = vpack.c.b16 %v723, %v719
    %v1192 = vpack.c.b16 %v724, %v720
    %v1193 = vpack.c.b16 %v725, %v721
    %v1194 = vpack.c.b16 %v726, %v722
    %v1195 = vpack.c.b16 %v731, %v727
    %v1196 = vpack.c.b16 %v732, %v728
    %v1197 = vpack.c.b16 %v733, %v729
    %v1198 = vpack.c.b16 %v734, %v730
    %v1199 = vpack.c.b16 %v739, %v735
    %v1200 = vpack.c.b16 %v740, %v736
    %v1201 = vpack.c.b16 %v741, %v737
    %v1202 = vpack.c.b16 %v742, %v738
    %v1203 = vpack.c.b16 %v747, %v743
    %v1204 = vpack.c.b16 %v748, %v744
    %v1205 = vpack.c.b16 %v749, %v745
    %v1206 = vpack.c.b16 %v750, %v746
    %v1207 = vpack.c.b16 %v755, %v751
    %v1208 = vpack.c.b16 %v756, %v752
    %v1209 = vpack.c.b16 %v757, %v753
    %v1210 = vpack.c.b16 %v758, %v754
    %v1211 = vpack.c.b16 %v763, %v759
    %v1212 = vpack.c.b16 %v764, %v760
    %v1213 = vpack.c.b16 %v765, %v761
    %v1214 = vpack.c.b16 %v766, %v762
    %v1215 = vpack.c.b16 %v771, %v767
    %v1216 = vpack.c.b16 %v772, %v768
    %v1217 = vpack.c.b16 %v773, %v769
    %v1218 = vpack.c.b16 %v774, %v770
    %v1219 = vpack.c.b16 %v779, %v775
    %v1220 = vpack.c.b16 %v780, %v776
    %v1221 = vpack.c.b16 %v781, %v777
    %v1222 = vpack.c.b16 %v782, %v778
    %v1223 = vpack.c.b16 %v787, %v783
    %v1224 = vpack.c.b16 %v788, %v784
    %v1225 = vpack.c.b16 %v789, %v785
    %v1226 = vpack.c.b16 %v790, %v786
    %v1227 = vpack.c.b16 %v795, %v791
    %v1228 = vpack.c.b16 %v796, %v792
    %v1229 = vpack.c.b16 %v797, %v793
    %v1230 = vpack.c.b16 %v798, %v794
    %v1231 = vpack.c.b16 %v803, %v799
    %v1232 = vpack.c.b16 %v804, %v800
    %v1233 = vpack.c.b16 %v805, %v801
    %v1234 = vpack.c.b16 %v806, %v802
    %v1235 = vpack.c.b16 %v811, %v807
    %v1236 = vpack.c.b16 %v812, %v808
    %v1237 = vpack.c.b16 %v813, %v809
    %v1238 = vpack.c.b16 %v814, %v810
    %v1239 = vpack.c.b16 %v819, %v815
    %v1240 = vpack.c.b16 %v820, %v816
    %v1241 = vpack.c.b16 %v821, %v817
    %v1242 = vpack.c.b16 %v822, %v818
    %v1243 = vpack.c.b16 %v827, %v823
    %v1244 = vpack.c.b16 %v828, %v824
    %v1245 = vpack.c.b16 %v829, %v825
    %v1246 = vpack.c.b16 %v830, %v826
    %v1247 = vpack.c.b16 %v835, %v831
    %v1248 = vpack.c.b16 %v836, %v832
    %v1249 = vpack.c.b16 %v837, %v833
    %v1250 = vpack.c.b16 %v838, %v834
    %v1251 = vpack.c.b16 %v843, %v839
    %v1252 = vpack.c.b16 %v844, %v840
    %v1253 = vpack.c.b16 %v845, %v841
    %v1254 = vpack.c.b16 %v846, %v842
    %v1255 = vpack.c.b16 %v851, %v847
    %v1256 = vpack.c.b16 %v852, %v848
    %v1257 = vpack.c.b16 %v853, %v849
    %v1258 = vpack.c.b16 %v854, %v850
    %v1259 = vpack.c.b16 %v859, %v855
    %v1260 = vpack.c.b16 %v860, %v856
    %v1261 = vpack.c.b16 %v861, %v857
    %v1262 = vpack.c.b16 %v862, %v858
    %v1263 = vpack.c.b16 %v867, %v863
    %v1264 = vpack.c.b16 %v868, %v864
    %v1265 = vpack.c.b16 %v869, %v865
    %v1266 = vpack.c.b16 %v870, %v866
    %v1267 = vpack.c.b16 %v875, %v871
    %v1268 = vpack.c.b16 %v876, %v872
    %v1269 = vpack.c.b16 %v877, %v873
    %v1270 = vpack.c.b16 %v878, %v874
    %v1271 = vpack.c.b16 %v883, %v879
    %v1272 = vpack.c.b16 %v884, %v880
    %v1273 = vpack.c.b16 %v885, %v881
    %v1274 = vpack.c.b16 %v886, %v882
    %v1275 = vpack.c.b16 %v891, %v887
    %v1276 = vpack.c.b16 %v892, %v888
    %v1277 = vpack.c.b16 %v893, %v889
    %v1278 = vpack.c.b16 %v894, %v890
    %v1279 = vpack.c.b16 %v899, %v895
    %v1280 = vpack.c.b16 %v900, %v896
    %v1281 = vpack.c.b16 %v901, %v897
    %v1282 = vpack.c.b16 %v902, %v898
    %v1283 = vpack.c.b16 %v907, %v903
    %v1284 = vpack.c.b16 %v908, %v904
    %v1285 = vpack.c.b16 %v909, %v905
    %v1286 = vpack.c.b16 %v910, %v906
    %v1287 = vpack.c.b16 %v915, %v911
    %v1288 = vpack.c.b16 %v916, %v912
    %v1289 = vpack.c.b16 %v917, %v913
    %v1290 = vpack.c.b16 %v918, %v914
    %v1291 = vpack.c.b16 %v923, %v919
    %v1292 = vpack.c.b16 %v924, %v920
    %v1293 = vpack.c.b16 %v925, %v921
    %v1294 = vpack.c.b16 %v926, %v922
    %v1295 = vpack.c.b16 %v931, %v927
    %v1296 = vpack.c.b16 %v932, %v928
    %v1297 = vpack.c.b16 %v933, %v929
    %v1298 = vpack.c.b16 %v934, %v930
    %v1299 = vpack.c.b16 %v939, %v935
    %v1300 = vpack.c.b16 %v940, %v936
    %v1301 = vpack.c.b16 %v941, %v937
    %v1302 = vpack.c.b16 %v942, %v938
    %v1303 = vpack.c.b16 %v947, %v943
    %v1304 = vpack.c.b16 %v948, %v944
    %v1305 = vpack.c.b16 %v949, %v945
    %v1306 = vpack.c.b16 %v950, %v946
    %v1307 = vpack.c.b16 %v955, %v951
    %v1308 = vpack.c.b16 %v956, %v952
    %v1309 = vpack.c.b16 %v957, %v953
    %v1310 = vpack.c.b16 %v958, %v954
    %v1311 = vpack.c.b16 %v963, %v959
    %v1312 = vpack.c.b16 %v964, %v960
    %v1313 = vpack.c.b16 %v965, %v961
    %v1314 = vpack.c.b16 %v966, %v962
    %v1315 = vpack.c.b16 %v971, %v967
    %v1316 = vpack.c.b16 %v972, %v968
    %v1317 = vpack.c.b16 %v973, %v969
    %v1318 = vpack.c.b16 %v974, %v970
    %v1319 = vpack.c.b16 %v979, %v975
    %v1320 = vpack.c.b16 %v980, %v976
    %v1321 = vpack.c.b16 %v981, %v977
    %v1322 = vpack.c.b16 %v982, %v978
    %v1323 = vpack.c.b16 %v987, %v983
    %v1324 = vpack.c.b16 %v988, %v984
    %v1325 = vpack.c.b16 %v989, %v985
    %v1326 = vpack.c.b16 %v990, %v986
    %v1327 = vpack.c.b16 %v995, %v991
    %v1328 = vpack.c.b16 %v996, %v992
    %v1329 = vpack.c.b16 %v997, %v993
    %v1330 = vpack.c.b16 %v998, %v994
    %v1331 = vpack.c.b16 %v1003, %v999
    %v1332 = vpack.c.b16 %v1004, %v1000
    %v1333 = vpack.c.b16 %v1005, %v1001
    %v1334 = vpack.c.b16 %v1006, %v1002
    %v1335 = vpack.c.b16 %v1011, %v1007
    %v1336 = vpack.c.b16 %v1012, %v1008
    %v1337 = vpack.c.b16 %v1013, %v1009
    %v1338 = vpack.c.b16 %v1014, %v1010
    %v1339 = vpack.c.b16 %v1019, %v1015
    %v1340 = vpack.c.b16 %v1020, %v1016
    %v1341 = vpack.c.b16 %v1021, %v1017
    %v1342 = vpack.c.b16 %v1022, %v1018
    %v1343 = vpack.c.b16 %v1027, %v1023
    %v1344 = vpack.c.b16 %v1028, %v1024
    %v1345 = vpack.c.b16 %v1029, %v1025
    %v1346 = vpack.c.b16 %v1030, %v1026
    %v1347 = vpack.c.b16 %v1035, %v1031
    %v1348 = vpack.c.b16 %v1036, %v1032
    %v1349 = vpack.c.b16 %v1037, %v1033
    %v1350 = vpack.c.b16 %v1038, %v1034
    %v1351 = vpack.c.b16 %v1043, %v1039
    %v1352 = vpack.c.b16 %v1044, %v1040
    %v1353 = vpack.c.b16 %v1045, %v1041
    %v1354 = vpack.c.b16 %v1046, %v1042
    %v1355 = vpack.c.b16 %v1051, %v1047
    %v1356 = vpack.c.b16 %v1052, %v1048
    %v1357 = vpack.c.b16 %v1053, %v1049
    %v1358 = vpack.c.b16 %v1054, %v1050
    %v1359 = vpack.c.b16 %v1059, %v1055
    %v1360 = vpack.c.b16 %v1060, %v1056
    %v1361 = vpack.c.b16 %v1061, %v1057
    %v1362 = vpack.c.b16 %v1062, %v1058
    %v1363 = vpack.c.b16 %v1067, %v1063
    %v1364 = vpack.c.b16 %v1068, %v1064
    %v1365 = vpack.c.b16 %v1069, %v1065
    %v1366 = vpack.c.b16 %v1070, %v1066
    %v1367 = vpack.c.b16 %v1075, %v1071
    %v1368 = vpack.c.b16 %v1076, %v1072
    %v1369 = vpack.c.b16 %v1077, %v1073
    %v1370 = vpack.c.b16 %v1078, %v1074
    %v1371 = vpack.c.b16 %v1083, %v1079
    %v1372 = vpack.c.b16 %v1084, %v1080
    %v1373 = vpack.c.b16 %v1085, %v1081
    %v1374 = vpack.c.b16 %v1086, %v1082
    %v1375 = vpack.c.b16 %v1091, %v1087
    %v1376 = vpack.c.b16 %v1092, %v1088
    %v1377 = vpack.c.b16 %v1093, %v1089
    %v1378 = vpack.c.b16 %v1094, %v1090
    %v1379 = vpack.c.b16 %v1099, %v1095
    %v1380 = vpack.c.b16 %v1100, %v1096
    %v1381 = vpack.c.b16 %v1101, %v1097
    %v1382 = vpack.c.b16 %v1102, %v1098
    %v1383 = vpack.c.b16 %v1107, %v1103
    %v1384 = vpack.c.b16 %v1108, %v1104
    %v1385 = vpack.c.b16 %v1109, %v1105
    %v1386 = vpack.c.b16 %v1110, %v1106
    %v1387 = vpack.c.b16 %v1115, %v1111
    %v1388 = vpack.c.b16 %v1116, %v1112
    %v1389 = vpack.c.b16 %v1117, %v1113
    %v1390 = vpack.c.b16 %v1118, %v1114
    %v1391 = vpack.c.b16 %v1123, %v1119
    %v1392 = vpack.c.b16 %v1124, %v1120
    %v1393 = vpack.c.b16 %v1125, %v1121
    %v1394 = vpack.c.b16 %v1126, %v1122
    %v1395 = vpack.c.b16 %v1131, %v1127
    %v1396 = vpack.c.b16 %v1132, %v1128
    %v1397 = vpack.c.b16 %v1133, %v1129
    %v1398 = vpack.c.b16 %v1134, %v1130
    %v1399 = vpack.c.b16 %v1139, %v1135
    %v1400 = vpack.c.b16 %v1140, %v1136
    %v1401 = vpack.c.b16 %v1141, %v1137
    %v1402 = vpack.c.b16 %v1142, %v1138
    %v1403 = vpack.c.b16 %v1147, %v1143
    %v1404 = vpack.c.b16 %v1148, %v1144
    %v1405 = vpack.c.b16 %v1149, %v1145
    %v1406 = vpack.c.b16 %v1150, %v1146
    %1663 = vmatpush.bf16.msra.mxu0 %v1179
    %1664 = vmatpush.bf16.msra.mxu0 %v1175
    %1665 = vmatpush.bf16.msra.mxu0 %v1171
    %1666 = vmatpush.bf16.msra.mxu0 %v1167
    %1667 = vmatpush.bf16.msra.mxu0 %v1163
    %1668 = vmatpush.bf16.msra.mxu0 %v1159
    %1669 = vmatpush.bf16.msra.mxu0 %v1155
    %1670 = vmatpush.bf16.msra.mxu0 %v1151
    %1671 = vmatmul.bf16.gmra.mxu0 %v111
    %v1672 = vpop.f32.mrf.mxu0
    %v1673 = vadd.f32 0.0, %v1672
    %v1674 = vpop.f32.mrf.mxu0
    %1675 = vdwg.mxu0
    %1676 = vmatpush.bf16.msra.mxu0 %v1211
    %1677 = vmatpush.bf16.msra.mxu0 %v1207
    %1678 = vmatpush.bf16.msra.mxu0 %v1203
    %1679 = vmatpush.bf16.msra.mxu0 %v1199
    %1680 = vmatpush.bf16.msra.mxu0 %v1195
    %1681 = vmatpush.bf16.msra.mxu0 %v1191
    %1682 = vmatpush.bf16.msra.mxu0 %v1187
    %1683 = vmatpush.bf16.msra.mxu0 %v1183
    %1684 = vmatmul.bf16.gmra.mxu0 %v112
    %v1685 = vpop.f32.mrf.mxu0
    %v1686 = vadd.f32 %v1673, %v1685
    %v1687 = vpop.f32.mrf.mxu0
    %1688 = vdwg.mxu0
    %1689 = vmatpush.bf16.msra.mxu0 %v1243
    %1690 = vmatpush.bf16.msra.mxu0 %v1239
    %1691 = vmatpush.bf16.msra.mxu0 %v1235
    %1692 = vmatpush.bf16.msra.mxu0 %v1231
    %1693 = vmatpush.bf16.msra.mxu0 %v1227
    %1694 = vmatpush.bf16.msra.mxu0 %v1223
    %1695 = vmatpush.bf16.msra.mxu0 %v1219
    %1696 = vmatpush.bf16.msra.mxu0 %v1215
    %1697 = vmatmul.bf16.gmra.mxu0 %v113
    %v1698 = vpop.f32.mrf.mxu0
    %v1699 = vadd.f32 %v1686, %v1698
    %v1700 = vpop.f32.mrf.mxu0
    %1701 = vdwg.mxu0
    %1702 = vmatpush.bf16.msra.mxu0 %v1275
    %1703 = vmatpush.bf16.msra.mxu0 %v1271
    %1704 = vmatpush.bf16.msra.mxu0 %v1267
    %1705 = vmatpush.bf16.msra.mxu0 %v1263
    %1706 = vmatpush.bf16.msra.mxu0 %v1259
    %1707 = vmatpush.bf16.msra.mxu0 %v1255
    %1708 = vmatpush.bf16.msra.mxu0 %v1251
    %1709 = vmatpush.bf16.msra.mxu0 %v1247
    %1710 = vmatmul.bf16.gmra.mxu0 %v114
    %v1711 = vpop.f32.mrf.mxu0
    %v1712 = vadd.f32 %v1699, %v1711
    %v1713 = vpop.f32.mrf.mxu0
    %1714 = vdwg.mxu0
    %1715 = vmatpush.bf16.msra.mxu0 %v1307
    %1716 = vmatpush.bf16.msra.mxu0 %v1303
    %1717 = vmatpush.bf16.msra.mxu0 %v1299
    %1718 = vmatpush.bf16.msra.mxu0 %v1295
    %1719 = vmatpush.bf16.msra.mxu0 %v1291
    %1720 = vmatpush.bf16.msra.mxu0 %v1287
    %1721 = vmatpush.bf16.msra.mxu0 %v1283
    %1722 = vmatpush.bf16.msra.mxu0 %v1279
    %1723 = vmatmul.bf16.gmra.mxu0 %v115
    %v1724 = vpop.f32.mrf.mxu0
    %v1725 = vadd.f32 %v1712, %v1724
    %v1726 = vpop.f32.mrf.mxu0
    %1727 = vdwg.mxu0
    %1728 = vmatpush.bf16.msra.mxu0 %v1339
    %1729 = vmatpush.bf16.msra.mxu0 %v1335
    %1730 = vmatpush.bf16.msra.mxu0 %v1331
    %1731 = vmatpush.bf16.msra.mxu0 %v1327
    %1732 = vmatpush.bf16.msra.mxu0 %v1323
    %1733 = vmatpush.bf16.msra.mxu0 %v1319
    %1734 = vmatpush.bf16.msra.mxu0 %v1315
    %1735 = vmatpush.bf16.msra.mxu0 %v1311
    %1736 = vmatmul.bf16.gmra.mxu0 %v116
    %v1737 = vpop.f32.mrf.mxu0
    %v1738 = vadd.f32 %v1725, %v1737
    %v1739 = vpop.f32.mrf.mxu0
    %1740 = vdwg.mxu0
    %1741 = vmatpush.bf16.msra.mxu0 %v1371
    %1742 = vmatpush.bf16.msra.mxu0 %v1367
    %1743 = vmatpush.bf16.msra.mxu0 %v1363
    %1744 = vmatpush.bf16.msra.mxu0 %v1359
    %1745 = vmatpush.bf16.msra.mxu0 %v1355
    %1746 = vmatpush.bf16.msra.mxu0 %v1351
    %1747 = vmatpush.bf16.msra.mxu0 %v1347
    %1748 = vmatpush.bf16.msra.mxu0 %v1343
    %1749 = vmatmul.bf16.gmra.mxu0 %v117
    %v1750 = vpop.f32.mrf.mxu0
    %v1751 = vadd.f32 %v1738, %v1750
    %v1752 = vpop.f32.mrf.mxu0
    %1753 = vdwg.mxu0
    %1754 = vmatpush.bf16.msra.mxu0 %v1403
    %1755 = vmatpush.bf16.msra.mxu0 %v1399
    %1756 = vmatpush.bf16.msra.mxu0 %v1395
    %1757 = vmatpush.bf16.msra.mxu0 %v1391
    %1758 = vmatpush.bf16.msra.mxu0 %v1387
    %1759 = vmatpush.bf16.msra.mxu0 %v1383
    %1760 = vmatpush.bf16.msra.mxu0 %v1379
    %1761 = vmatpush.bf16.msra.mxu0 %v1375
    %1762 = vmatmul.bf16.gmra.mxu0 %v118
    %v1763 = vpop.f32.mrf.mxu0
    %v1764 = vadd.f32 %v1751, %v1763
    %v1765 = vpop.f32.mrf.mxu0
    %1766 = vdwg.mxu0
    %1767 = vmatpush.bf16.msra.mxu0 %v1180
    %1768 = vmatpush.bf16.msra.mxu0 %v1176
    %1769 = vmatpush.bf16.msra.mxu0 %v1172
    %1770 = vmatpush.bf16.msra.mxu0 %v1168
    %1771 = vmatpush.bf16.msra.mxu0 %v1164
    %1772 = vmatpush.bf16.msra.mxu0 %v1160
    %1773 = vmatpush.bf16.msra.mxu0 %v1156
    %1774 = vmatpush.bf16.msra.mxu0 %v1152
    %1775 = vmatmul.bf16.gmra.mxu0 %v111
    %v1776 = vpop.f32.mrf.mxu0
    %v1777 = vadd.f32 0.0, %v1776
    %v1778 = vpop.f32.mrf.mxu0
    %1779 = vdwg.mxu0
    %1780 = vmatpush.bf16.msra.mxu0 %v1212
    %1781 = vmatpush.bf16.msra.mxu0 %v1208
    %1782 = vmatpush.bf16.msra.mxu0 %v1204
    %1783 = vmatpush.bf16.msra.mxu0 %v1200
    %1784 = vmatpush.bf16.msra.mxu0 %v1196
    %1785 = vmatpush.bf16.msra.mxu0 %v1192
    %1786 = vmatpush.bf16.msra.mxu0 %v1188
    %1787 = vmatpush.bf16.msra.mxu0 %v1184
    %1788 = vmatmul.bf16.gmra.mxu0 %v112
    %v1789 = vpop.f32.mrf.mxu0
    %v1790 = vadd.f32 %v1777, %v1789
    %v1791 = vpop.f32.mrf.mxu0
    %1792 = vdwg.mxu0
    %1793 = vmatpush.bf16.msra.mxu0 %v1244
    %1794 = vmatpush.bf16.msra.mxu0 %v1240
    %1795 = vmatpush.bf16.msra.mxu0 %v1236
    %1796 = vmatpush.bf16.msra.mxu0 %v1232
    %1797 = vmatpush.bf16.msra.mxu0 %v1228
    %1798 = vmatpush.bf16.msra.mxu0 %v1224
    %1799 = vmatpush.bf16.msra.mxu0 %v1220
    %1800 = vmatpush.bf16.msra.mxu0 %v1216
    %1801 = vmatmul.bf16.gmra.mxu0 %v113
    %v1802 = vpop.f32.mrf.mxu0
    %v1803 = vadd.f32 %v1790, %v1802
    %v1804 = vpop.f32.mrf.mxu0
    %1805 = vdwg.mxu0
    %1806 = vmatpush.bf16.msra.mxu0 %v1276
    %1807 = vmatpush.bf16.msra.mxu0 %v1272
    %1808 = vmatpush.bf16.msra.mxu0 %v1268
    %1809 = vmatpush.bf16.msra.mxu0 %v1264
    %1810 = vmatpush.bf16.msra.mxu0 %v1260
    %1811 = vmatpush.bf16.msra.mxu0 %v1256
    %1812 = vmatpush.bf16.msra.mxu0 %v1252
    %1813 = vmatpush.bf16.msra.mxu0 %v1248
    %1814 = vmatmul.bf16.gmra.mxu0 %v114
    %v1815 = vpop.f32.mrf.mxu0
    %v1816 = vadd.f32 %v1803, %v1815
    %v1817 = vpop.f32.mrf.mxu0
    %1818 = vdwg.mxu0
    %1819 = vmatpush.bf16.msra.mxu0 %v1308
    %1820 = vmatpush.bf16.msra.mxu0 %v1304
    %1821 = vmatpush.bf16.msra.mxu0 %v1300
    %1822 = vmatpush.bf16.msra.mxu0 %v1296
    %1823 = vmatpush.bf16.msra.mxu0 %v1292
    %1824 = vmatpush.bf16.msra.mxu0 %v1288
    %1825 = vmatpush.bf16.msra.mxu0 %v1284
    %1826 = vmatpush.bf16.msra.mxu0 %v1280
    %1827 = vmatmul.bf16.gmra.mxu0 %v115
    %v1828 = vpop.f32.mrf.mxu0
    %v1829 = vadd.f32 %v1816, %v1828
    %v1830 = vpop.f32.mrf.mxu0
    %1831 = vdwg.mxu0
    %1832 = vmatpush.bf16.msra.mxu0 %v1340
    %1833 = vmatpush.bf16.msra.mxu0 %v1336
    %1834 = vmatpush.bf16.msra.mxu0 %v1332
    %1835 = vmatpush.bf16.msra.mxu0 %v1328
    %1836 = vmatpush.bf16.msra.mxu0 %v1324
    %1837 = vmatpush.bf16.msra.mxu0 %v1320
    %1838 = vmatpush.bf16.msra.mxu0 %v1316
    %1839 = vmatpush.bf16.msra.mxu0 %v1312
    %1840 = vmatmul.bf16.gmra.mxu0 %v116
    %v1841 = vpop.f32.mrf.mxu0
    %v1842 = vadd.f32 %v1829, %v1841
    %v1843 = vpop.f32.mrf.mxu0
    %1844 = vdwg.mxu0
    %1845 = vmatpush.bf16.msra.mxu0 %v1372
    %1846 = vmatpush.bf16.msra.mxu0 %v1368
    %1847 = vmatpush.bf16.msra.mxu0 %v1364
    %1848 = vmatpush.bf16.msra.mxu0 %v1360
    %1849 = vmatpush.bf16.msra.mxu0 %v1356
    %1850 = vmatpush.bf16.msra.mxu0 %v1352
    %1851 = vmatpush.bf16.msra.mxu0 %v1348
    %1852 = vmatpush.bf16.msra.mxu0 %v1344
    %1853 = vmatmul.bf16.gmra.mxu0 %v117
    %v1854 = vpop.f32.mrf.mxu0
    %v1855 = vadd.f32 %v1842, %v1854
    %v1856 = vpop.f32.mrf.mxu0
    %1857 = vdwg.mxu0
    %1858 = vmatpush.bf16.msra.mxu0 %v1404
    %1859 = vmatpush.bf16.msra.mxu0 %v1400
    %1860 = vmatpush.bf16.msra.mxu0 %v1396
    %1861 = vmatpush.bf16.msra.mxu0 %v1392
    %1862 = vmatpush.bf16.msra.mxu0 %v1388
    %1863 = vmatpush.bf16.msra.mxu0 %v1384
    %1864 = vmatpush.bf16.msra.mxu0 %v1380
    %1865 = vmatpush.bf16.msra.mxu0 %v1376
    %1866 = vmatmul.bf16.gmra.mxu0 %v118
    %v1867 = vpop.f32.mrf.mxu0
    %v1868 = vadd.f32 %v1855, %v1867
    %v1869 = vpop.f32.mrf.mxu0
    %1870 = vdwg.mxu0
    %1871 = vmatpush.bf16.msra.mxu0 %v1181
    %1872 = vmatpush.bf16.msra.mxu0 %v1177
    %1873 = vmatpush.bf16.msra.mxu0 %v1173
    %1874 = vmatpush.bf16.msra.mxu0 %v1169
    %1875 = vmatpush.bf16.msra.mxu0 %v1165
    %1876 = vmatpush.bf16.msra.mxu0 %v1161
    %1877 = vmatpush.bf16.msra.mxu0 %v1157
    %1878 = vmatpush.bf16.msra.mxu0 %v1153
    %1879 = vmatmul.bf16.gmra.mxu0 %v111
    %v1880 = vpop.f32.mrf.mxu0
    %v1881 = vadd.f32 0.0, %v1880
    %v1882 = vpop.f32.mrf.mxu0
    %1883 = vdwg.mxu0
    %1884 = vmatpush.bf16.msra.mxu0 %v1213
    %1885 = vmatpush.bf16.msra.mxu0 %v1209
    %1886 = vmatpush.bf16.msra.mxu0 %v1205
    %1887 = vmatpush.bf16.msra.mxu0 %v1201
    %1888 = vmatpush.bf16.msra.mxu0 %v1197
    %1889 = vmatpush.bf16.msra.mxu0 %v1193
    %1890 = vmatpush.bf16.msra.mxu0 %v1189
    %1891 = vmatpush.bf16.msra.mxu0 %v1185
    %1892 = vmatmul.bf16.gmra.mxu0 %v112
    %v1893 = vpop.f32.mrf.mxu0
    %v1894 = vadd.f32 %v1881, %v1893
    %v1895 = vpop.f32.mrf.mxu0
    %1896 = vdwg.mxu0
    %1897 = vmatpush.bf16.msra.mxu0 %v1245
    %1898 = vmatpush.bf16.msra.mxu0 %v1241
    %1899 = vmatpush.bf16.msra.mxu0 %v1237
    %1900 = vmatpush.bf16.msra.mxu0 %v1233
    %1901 = vmatpush.bf16.msra.mxu0 %v1229
    %1902 = vmatpush.bf16.msra.mxu0 %v1225
    %1903 = vmatpush.bf16.msra.mxu0 %v1221
    %1904 = vmatpush.bf16.msra.mxu0 %v1217
    %1905 = vmatmul.bf16.gmra.mxu0 %v113
    %v1906 = vpop.f32.mrf.mxu0
    %v1907 = vadd.f32 %v1894, %v1906
    %v1908 = vpop.f32.mrf.mxu0
    %1909 = vdwg.mxu0
    %1910 = vmatpush.bf16.msra.mxu0 %v1277
    %1911 = vmatpush.bf16.msra.mxu0 %v1273
    %1912 = vmatpush.bf16.msra.mxu0 %v1269
    %1913 = vmatpush.bf16.msra.mxu0 %v1265
    %1914 = vmatpush.bf16.msra.mxu0 %v1261
    %1915 = vmatpush.bf16.msra.mxu0 %v1257
    %1916 = vmatpush.bf16.msra.mxu0 %v1253
    %1917 = vmatpush.bf16.msra.mxu0 %v1249
    %1918 = vmatmul.bf16.gmra.mxu0 %v114
    %v1919 = vpop.f32.mrf.mxu0
    %v1920 = vadd.f32 %v1907, %v1919
    %v1921 = vpop.f32.mrf.mxu0
    %1922 = vdwg.mxu0
    %1923 = vmatpush.bf16.msra.mxu0 %v1309
    %1924 = vmatpush.bf16.msra.mxu0 %v1305
    %1925 = vmatpush.bf16.msra.mxu0 %v1301
    %1926 = vmatpush.bf16.msra.mxu0 %v1297
    %1927 = vmatpush.bf16.msra.mxu0 %v1293
    %1928 = vmatpush.bf16.msra.mxu0 %v1289
    %1929 = vmatpush.bf16.msra.mxu0 %v1285
    %1930 = vmatpush.bf16.msra.mxu0 %v1281
    %1931 = vmatmul.bf16.gmra.mxu0 %v115
    %v1932 = vpop.f32.mrf.mxu0
    %v1933 = vadd.f32 %v1920, %v1932
    %v1934 = vpop.f32.mrf.mxu0
    %1935 = vdwg.mxu0
    %1936 = vmatpush.bf16.msra.mxu0 %v1341
    %1937 = vmatpush.bf16.msra.mxu0 %v1337
    %1938 = vmatpush.bf16.msra.mxu0 %v1333
    %1939 = vmatpush.bf16.msra.mxu0 %v1329
    %1940 = vmatpush.bf16.msra.mxu0 %v1325
    %1941 = vmatpush.bf16.msra.mxu0 %v1321
    %1942 = vmatpush.bf16.msra.mxu0 %v1317
    %1943 = vmatpush.bf16.msra.mxu0 %v1313
    %1944 = vmatmul.bf16.gmra.mxu0 %v116
    %v1945 = vpop.f32.mrf.mxu0
    %v1946 = vadd.f32 %v1933, %v1945
    %v1947 = vpop.f32.mrf.mxu0
    %1948 = vdwg.mxu0
    %1949 = vmatpush.bf16.msra.mxu0 %v1373
    %1950 = vmatpush.bf16.msra.mxu0 %v1369
    %1951 = vmatpush.bf16.msra.mxu0 %v1365
    %1952 = vmatpush.bf16.msra.mxu0 %v1361
    %1953 = vmatpush.bf16.msra.mxu0 %v1357
    %1954 = vmatpush.bf16.msra.mxu0 %v1353
    %1955 = vmatpush.bf16.msra.mxu0 %v1349
    %1956 = vmatpush.bf16.msra.mxu0 %v1345
    %1957 = vmatmul.bf16.gmra.mxu0 %v117
    %v1958 = vpop.f32.mrf.mxu0
    %v1959 = vadd.f32 %v1946, %v1958
    %v1960 = vpop.f32.mrf.mxu0
    %1961 = vdwg.mxu0
    %1962 = vmatpush.bf16.msra.mxu0 %v1405
    %1963 = vmatpush.bf16.msra.mxu0 %v1401
    %1964 = vmatpush.bf16.msra.mxu0 %v1397
    %1965 = vmatpush.bf16.msra.mxu0 %v1393
    %1966 = vmatpush.bf16.msra.mxu0 %v1389
    %1967 = vmatpush.bf16.msra.mxu0 %v1385
    %1968 = vmatpush.bf16.msra.mxu0 %v1381
    %1969 = vmatpush.bf16.msra.mxu0 %v1377
    %1970 = vmatmul.bf16.gmra.mxu0 %v118
    %v1971 = vpop.f32.mrf.mxu0
    %v1972 = vadd.f32 %v1959, %v1971
    %v1973 = vpop.f32.mrf.mxu0
    %1974 = vdwg.mxu0
    %1975 = vmatpush.bf16.msra.mxu0 %v1182
    %1976 = vmatpush.bf16.msra.mxu0 %v1178
    %1977 = vmatpush.bf16.msra.mxu0 %v1174
    %1978 = vmatpush.bf16.msra.mxu0 %v1170
    %1979 = vmatpush.bf16.msra.mxu0 %v1166
    %1980 = vmatpush.bf16.msra.mxu0 %v1162
    %1981 = vmatpush.bf16.msra.mxu0 %v1158
    %1982 = vmatpush.bf16.msra.mxu0 %v1154
    %1983 = vmatmul.bf16.gmra.mxu0 %v111
    %v1984 = vpop.f32.mrf.mxu0
    %v1985 = vadd.f32 0.0, %v1984
    %v1986 = vpop.f32.mrf.mxu0
    %1987 = vdwg.mxu0
    %1988 = vmatpush.bf16.msra.mxu0 %v1214
    %1989 = vmatpush.bf16.msra.mxu0 %v1210
    %1990 = vmatpush.bf16.msra.mxu0 %v1206
    %1991 = vmatpush.bf16.msra.mxu0 %v1202
    %1992 = vmatpush.bf16.msra.mxu0 %v1198
    %1993 = vmatpush.bf16.msra.mxu0 %v1194
    %1994 = vmatpush.bf16.msra.mxu0 %v1190
    %1995 = vmatpush.bf16.msra.mxu0 %v1186
    %1996 = vmatmul.bf16.gmra.mxu0 %v112
    %v1997 = vpop.f32.mrf.mxu0
    %v1998 = vadd.f32 %v1985, %v1997
    %v1999 = vpop.f32.mrf.mxu0
    %2000 = vdwg.mxu0
    %2001 = vmatpush.bf16.msra.mxu0 %v1246
    %2002 = vmatpush.bf16.msra.mxu0 %v1242
    %2003 = vmatpush.bf16.msra.mxu0 %v1238
    %2004 = vmatpush.bf16.msra.mxu0 %v1234
    %2005 = vmatpush.bf16.msra.mxu0 %v1230
    %2006 = vmatpush.bf16.msra.mxu0 %v1226
    %2007 = vmatpush.bf16.msra.mxu0 %v1222
    %2008 = vmatpush.bf16.msra.mxu0 %v1218
    %2009 = vmatmul.bf16.gmra.mxu0 %v113
    %v2010 = vpop.f32.mrf.mxu0
    %v2011 = vadd.f32 %v1998, %v2010
    %v2012 = vpop.f32.mrf.mxu0
    %2013 = vdwg.mxu0
    %2014 = vmatpush.bf16.msra.mxu0 %v1278
    %2015 = vmatpush.bf16.msra.mxu0 %v1274
    %2016 = vmatpush.bf16.msra.mxu0 %v1270
    %2017 = vmatpush.bf16.msra.mxu0 %v1266
    %2018 = vmatpush.bf16.msra.mxu0 %v1262
    %2019 = vmatpush.bf16.msra.mxu0 %v1258
    %2020 = vmatpush.bf16.msra.mxu0 %v1254
    %2021 = vmatpush.bf16.msra.mxu0 %v1250
    %2022 = vmatmul.bf16.gmra.mxu0 %v114
    %v2023 = vpop.f32.mrf.mxu0
    %v2024 = vadd.f32 %v2011, %v2023
    %v2025 = vpop.f32.mrf.mxu0
    %2026 = vdwg.mxu0
    %2027 = vmatpush.bf16.msra.mxu0 %v1310
    %2028 = vmatpush.bf16.msra.mxu0 %v1306
    %2029 = vmatpush.bf16.msra.mxu0 %v1302
    %2030 = vmatpush.bf16.msra.mxu0 %v1298
    %2031 = vmatpush.bf16.msra.mxu0 %v1294
    %2032 = vmatpush.bf16.msra.mxu0 %v1290
    %2033 = vmatpush.bf16.msra.mxu0 %v1286
    %2034 = vmatpush.bf16.msra.mxu0 %v1282
    %2035 = vmatmul.bf16.gmra.mxu0 %v115
    %v2036 = vpop.f32.mrf.mxu0
    %v2037 = vadd.f32 %v2024, %v2036
    %v2038 = vpop.f32.mrf.mxu0
    %2039 = vdwg.mxu0
    %2040 = vmatpush.bf16.msra.mxu0 %v1342
    %2041 = vmatpush.bf16.msra.mxu0 %v1338
    %2042 = vmatpush.bf16.msra.mxu0 %v1334
    %2043 = vmatpush.bf16.msra.mxu0 %v1330
    %2044 = vmatpush.bf16.msra.mxu0 %v1326
    %2045 = vmatpush.bf16.msra.mxu0 %v1322
    %2046 = vmatpush.bf16.msra.mxu0 %v1318
    %2047 = vmatpush.bf16.msra.mxu0 %v1314
    %2048 = vmatmul.bf16.gmra.mxu0 %v116
    %v2049 = vpop.f32.mrf.mxu0
    %v2050 = vadd.f32 %v2037, %v2049
    %v2051 = vpop.f32.mrf.mxu0
    %2052 = vdwg.mxu0
    %2053 = vmatpush.bf16.msra.mxu0 %v1374
    %2054 = vmatpush.bf16.msra.mxu0 %v1370
    %2055 = vmatpush.bf16.msra.mxu0 %v1366
    %2056 = vmatpush.bf16.msra.mxu0 %v1362
    %2057 = vmatpush.bf16.msra.mxu0 %v1358
    %2058 = vmatpush.bf16.msra.mxu0 %v1354
    %2059 = vmatpush.bf16.msra.mxu0 %v1350
    %2060 = vmatpush.bf16.msra.mxu0 %v1346
    %2061 = vmatmul.bf16.gmra.mxu0 %v117
    %v2062 = vpop.f32.mrf.mxu0
    %v2063 = vadd.f32 %v2050, %v2062
    %v2064 = vpop.f32.mrf.mxu0
    %2065 = vdwg.mxu0
    %2066 = vmatpush.bf16.msra.mxu0 %v1406
    %2067 = vmatpush.bf16.msra.mxu0 %v1402
    %2068 = vmatpush.bf16.msra.mxu0 %v1398
    %2069 = vmatpush.bf16.msra.mxu0 %v1394
    %2070 = vmatpush.bf16.msra.mxu0 %v1390
    %2071 = vmatpush.bf16.msra.mxu0 %v1386
    %2072 = vmatpush.bf16.msra.mxu0 %v1382
    %2073 = vmatpush.bf16.msra.mxu0 %v1378
    %2074 = vmatmul.bf16.gmra.mxu0 %v118
    %v2075 = vpop.f32.mrf.mxu0
    %v2076 = vadd.f32 %v2063, %v2075
    %v2077 = vpop.f32.mrf.mxu0
    %2078 = vdwg.mxu0
    %v2087 = vunpack.c.l.b16 %v119
    %v2088 = vunpack.c.h.b16 %v119
    %v2089 = vunpack.c.l.b16 %v120
    %v2090 = vunpack.c.h.b16 %v120
    %v2091 = vunpack.c.l.b16 %v121
    %v2092 = vunpack.c.h.b16 %v121
    %v2093 = vunpack.c.l.b16 %v122
    %v2094 = vunpack.c.h.b16 %v122
    %v2095 = vunpack.c.l.b16 %v123
    %v2096 = vunpack.c.h.b16 %v123
    %v2097 = vunpack.c.l.b16 %v124
    %v2098 = vunpack.c.h.b16 %v124
    %v2099 = vunpack.c.l.b16 %v125
    %v2100 = vunpack.c.h.b16 %v125
    %v2101 = vunpack.c.l.b16 %v126
    %v2102 = vunpack.c.h.b16 %v126
    %v2103 = vpack.c.b16 %v2091, %v2087
    %v2104 = vpack.c.b16 %v2092, %v2088
    %v2105 = vpack.c.b16 %v2093, %v2089
    %v2106 = vpack.c.b16 %v2094, %v2090
    %v2107 = vpack.c.b16 %v2099, %v2095
    %v2108 = vpack.c.b16 %v2100, %v2096
    %v2109 = vpack.c.b16 %v2101, %v2097
    %v2110 = vpack.c.b16 %v2102, %v2098
    %vm2119 = vcmask 261120
    %v2121 = vsel %vm2119, %v102, 0
    %2123 = vmatpush.bf16.msra.mxu0 0
    %2124 = vmatpush.bf16.msra.mxu0 0
    %2125 = vmatpush.bf16.msra.mxu0 0
    %2126 = vmatpush.bf16.msra.mxu0 0
    %2127 = vmatpush.bf16.msra.mxu0 0
    %2128 = vmatpush.bf16.msra.mxu0 0
    %2129 = vmatpush.bf16.msra.mxu0 %v2107
    %2130 = vmatpush.bf16.msra.mxu0 %v2103
    %2131 = vmatmul.bf16.gmra.mxu0 %v2121
    %v2132 = vpop.f32.mrf.mxu0
    %v2133 = vadd.f32 %v1764, %v2132
    %v2134 = vpop.f32.mrf.mxu0
    %2135 = vdwg.mxu0
    %2136 = vmatpush.bf16.msra.mxu0 0
    %2137 = vmatpush.bf16.msra.mxu0 0
    %2138 = vmatpush.bf16.msra.mxu0 0
    %2139 = vmatpush.bf16.msra.mxu0 0
    %2140 = vmatpush.bf16.msra.mxu0 0
    %2141 = vmatpush.bf16.msra.mxu0 0
    %2142 = vmatpush.bf16.msra.mxu0 %v2108
    %2143 = vmatpush.bf16.msra.mxu0 %v2104
    %2144 = vmatmul.bf16.gmra.mxu0 %v2121
    %v2145 = vpop.f32.mrf.mxu0
    %v2146 = vadd.f32 %v1868, %v2145
    %v2147 = vpop.f32.mrf.mxu0
    %2148 = vdwg.mxu0
    %2149 = vmatpush.bf16.msra.mxu0 0
    %2150 = vmatpush.bf16.msra.mxu0 0
    %2151 = vmatpush.bf16.msra.mxu0 0
    %2152 = vmatpush.bf16.msra.mxu0 0
    %2153 = vmatpush.bf16.msra.mxu0 0
    %2154 = vmatpush.bf16.msra.mxu0 0
    %2155 = vmatpush.bf16.msra.mxu0 %v2109
    %2156 = vmatpush.bf16.msra.mxu0 %v2105
    %2157 = vmatmul.bf16.gmra.mxu0 %v2121
    %v2158 = vpop.f32.mrf.mxu0
    %v2159 = vadd.f32 %v1972, %v2158
    %v2160 = vpop.f32.mrf.mxu0
    %2161 = vdwg.mxu0
    %2162 = vmatpush.bf16.msra.mxu0 0
    %2163 = vmatpush.bf16.msra.mxu0 0
    %2164 = vmatpush.bf16.msra.mxu0 0
    %2165 = vmatpush.bf16.msra.mxu0 0
    %2166 = vmatpush.bf16.msra.mxu0 0
    %2167 = vmatpush.bf16.msra.mxu0 0
    %2168 = vmatpush.bf16.msra.mxu0 %v2110
    %2169 = vmatpush.bf16.msra.mxu0 %v2106
    %2170 = vmatmul.bf16.gmra.mxu0 %v2121
    %v2171 = vpop.f32.mrf.mxu0
    %v2172 = vadd.f32 %v2076, %v2171
    %v2173 = vpop.f32.mrf.mxu0
    %2174 = vdwg.mxu0
    %v2175 = vld [vmem:[%s4] sm:$0xf]
    %v2177 = vperm.slane %v2175, 0
    %v2178 = vperm.slane %v2175, 1
    %v2179 = vperm.slane %v2175, 2
    %v2180 = vperm.slane %v2175, 3
    %v2185 = vadd.f32 %v2133, %v2177
    %v2186 = vadd.f32 %v2146, %v2178
    %v2187 = vadd.f32 %v2159, %v2179
    %v2188 = vadd.f32 %v2172, %v2180
    %v2189 = vmax.f32 %v2185, 0.0
    %v2190 = vmax.f32 %v2186, 0.0
    %v2191 = vmax.f32 %v2187, 0.0
    %v2192 = vmax.f32 %v2188, 0.0
    %v2193 = vld [vmem:[#allocation10] sm:$0xf]
    %v2195 = vperm.slane %v2193, 0
    %v2196 = vperm.slane %v2193, 1
    %v2197 = vperm.slane %v2193, 2
    %v2198 = vperm.slane %v2193, 3
    %v2203 = vmul.f32 %v2189, %v2195
    %v2204 = vmul.f32 %v2190, %v2196
    %v2205 = vmul.f32 %v2191, %v2197
    %v2206 = vmul.f32 %v2192, %v2198
    %v2207 = vadd.f32 %v2203, %v2204
    %v2208 = vadd.f32 %v2207, %v2205
    %v2209 = vadd.f32 %v2208, %v2206
    %2210 = vadd.xlane.f32.xlu0 %v2209
    %v2211 = vpop.xlane.xlu0 %2210
    %v2212 = vld [vmem:[#allocation2] sm:$0x1]
    %v2214 = vperm.slane %v2212, 0
    %v2216 = vadd.f32 %v2211, %v2214
    %v2217 = vsub.f32 0.0, %v2216
    %v2218 = vmul.f32 %v2217, 1.442695
    %v2219 = vpow.pop %v2218
    %v2220 = vadd.f32 %v2219, 1.0
    %v2221 = vrcp.pop %v2220
    %vm2222 = vcmask 7168
    %2223 = vst.msk [vmem:[%s7] sm:$0xff] %vm2222, %v2221
    // Predicated region
    $region50: #{tpu_custom_call.1} parent=1 // pred_check
      _
    $region51: #{tpu_custom_call.1} parent=1 // pred_check_branch
      %2225 = sbr.rel (0) target = $region53
    $region52: #{tpu_custom_call.1} parent=1 // pred_region
      _
    $region53: #{tpu_custom_call.1} parent=1 // pred_fallthru
      _
    // Predicated region
    $region54: #{tpu_custom_call.1} parent=1 // pred_check
      _
    $region55: #{tpu_custom_call.1} parent=1 // pred_check_branch
      %2227 = sbr.rel (0) target = $region57
    $region56: #{tpu_custom_call.1} parent=1 // pred_region
      _
    $region57: #{tpu_custom_call.1} parent=1 // pred_fallthru
      _
    %2228 = vsyncpa [#allocation4], 1
    %2229 = vsyncpa [#allocation6], 1
    %2230 = vsyncpa [#allocation9], 1

</llo_original>
